<compile_context>
chip_gen: v5e
topology: v5e:2x2
jax: 0.10.0
libtpu: 0.0.40
codegen_flags: <defaults>
</compile_context>

<pallas_src>
import jax
import jax.numpy as jnp
from jax import lax
from jax.experimental import pallas as pl
from jax.experimental.pallas import tpu as pltpu


def _round_up(a, b):
    return (a + b - 1) // b * b


def node_model_kernel(x_ref, ea_ref, row_ref, col_ref, inv_ref,
                      w1x_ref, w1e_ref, b1a_ref, w1b_ref, b1b_ref,
                      w2x_ref, w2m_ref, b2a_ref, w2b_ref, b2b_ref,
                      o_ref, acc_ref):
    k = pl.program_id(0)                      # edge-tile index (reduction axis)
    n_pad = x_ref.shape[0]                    # Np (full resident node dim)
    t_e = ea_ref.shape[0]                     # edge tile size

    @pl.when(k == 0)
    def _init():
        acc_ref[...] = jnp.zeros_like(acc_ref)

    # ---- gather x[row] via exact bf16 one-hot matmul on the MXU ----
    row = row_ref[...]                                         # (tE, 1) int32
    col = col_ref[...]                                         # (tE, 1) int32
    node_iota = lax.broadcasted_iota(jnp.int32, (t_e, n_pad), 1)
    g_oh = (node_iota == row).astype(jnp.bfloat16)             # exact 0/1
    x_row = jnp.dot(g_oh, x_ref[...],
                    preferred_element_type=jnp.float32)        # (tE, Dp)

    # ---- node_mlp_1 on cat([x[row], edge_attr]) via pre-split weights ----
    h = (jnp.dot(x_row.astype(jnp.bfloat16), w1x_ref[...],
                 preferred_element_type=jnp.float32)
         + jnp.dot(ea_ref[...], w1e_ref[...],
                   preferred_element_type=jnp.float32)
         + b1a_ref[...])
    h = jnp.maximum(h, 0.0)                                    # f32 elementwise
    out_e = (jnp.dot(h.astype(jnp.bfloat16), w1b_ref[...],
                     preferred_element_type=jnp.float32)
             + b1b_ref[...])                                   # (tE, Dp) f32

    # ---- scatter-add into the full (Np, Dp) accumulator: contract over the
    # edge axis directly (no materialized transpose of the one-hot).
    # Padded edges carry col = -1 and therefore hit no node. ----
    s_oh = (node_iota == col).astype(jnp.bfloat16)             # (tE, Np)
    acc_ref[...] += lax.dot_general(
        s_oh, out_e.astype(jnp.bfloat16),
        dimension_numbers=(((0,), (0,)), ((), ())),
        preferred_element_type=jnp.float32)                    # (Np, Dp)

    # TODO(synk): the torch forward also computes scatter_max(out, col) but
    # never uses its result (dead code), so it is intentionally omitted here.

    # ---- finalize: scatter-mean + node_mlp_2, lane-dense bf16 store ----
    @pl.when(k == pl.num_programs(0) - 1)
    def _finalize():
        mean = acc_ref[...] * inv_ref[...]                     # (Np,Dp)*(Np,1)
        h2 = (jnp.dot(x_ref[...], w2x_ref[...],
                      preferred_element_type=jnp.float32)
              + jnp.dot(mean.astype(jnp.bfloat16), w2m_ref[...],
                        preferred_element_type=jnp.float32)
              + b2a_ref[...])
        h2 = jnp.maximum(h2, 0.0)
        o_ref[...] = (jnp.dot(h2.astype(jnp.bfloat16), w2b_ref[...],
                              preferred_element_type=jnp.float32)
                      + b2b_ref[...]).astype(o_ref.dtype)


def node_model(x, edge_index, edge_attr, params, *, tile_e=256):
    """Pallas implementation of NodeModel.forward (dropout attr unused).

    VMEM footprint ~ Np*Dp*(4 acc + 2 x + 2 out) + 6*Dp^2*2 (weights)
    + O(tile_e*(Np + Dp)) per-step intermediates; must fit the derived
    vmem_limit.  For graphs where it doesn't, see the two-pass TODO above.
    """
    N, D = x.shape
    E = edge_attr.shape[0]
    w1a, b1a, w1b, b1b, w2a, b2a, w2b, b2b = params

    Dp = _round_up(D, 128)                       # lane-dense feature dim
    Np = _round_up(N, 128)                       # aligned gather K dim
    tile_e = int(max(16, min(_round_up(tile_e, 16), _round_up(E, 16))))
    Ep = _round_up(E, tile_e)

    # Zero padding is exact for the Linear/ReLU chain (padded weight rows/cols
    # and biases are zero). MXU operands are pre-cast to bf16 in the wrapper.
    x_p = jnp.pad(x, ((0, Np - N), (0, Dp - D))).astype(jnp.bfloat16)
    ea_p = jnp.pad(edge_attr, ((0, Ep - E), (0, Dp - D))).astype(jnp.bfloat16)
    row_p = jnp.pad(edge_index[0].astype(jnp.int32), (0, Ep - E)).reshape(Ep, 1)
    # Padded edges get col = -1 so they hit no node (no sum contribution).
    col_p = jnp.pad(edge_index[1].astype(jnp.int32), (0, Ep - E),
                    constant_values=-1).reshape(Ep, 1)

    # Scatter-mean denominator is a pure function of `col`: compute its exact
    # f32 reciprocal once here (O(E)) instead of carrying a count lane through
    # every MXU matmul inside the kernel.
    counts = jax.ops.segment_sum(jnp.ones((E,), jnp.float32),
                                 edge_index[1].astype(jnp.int32),
                                 num_segments=N)
    inv_p = jnp.pad(1.0 / jnp.maximum(counts, 1.0), (0, Np - N)).reshape(Np, 1)

    def pad_w(w):
        return jnp.pad(w, ((0, Dp - w.shape[0]),
                           (0, Dp - w.shape[1]))).astype(jnp.bfloat16)

    def pad_b(b):
        return jnp.pad(b, (0, Dp - b.shape[0])).reshape(1, Dp).astype(jnp.float32)

    # Pre-split the "concat" weights in the wrapper (no in-kernel slices).
    w1x, w1e = pad_w(w1a[:D]), pad_w(w1a[D:])
    w2x, w2m = pad_w(w2a[:D]), pad_w(w2a[D:])
    w1b_p, w2b_p = pad_w(w1b), pad_w(w2b)
    b1a_p, b1b_p, b2a_p, b2b_p = pad_b(b1a), pad_b(b1b), pad_b(b2a), pad_b(b2b)

    full = lambda k: (0, 0)
    edge = lambda k: (k, 0)
    grid_spec = pltpu.PrefetchScalarGridSpec(
        num_scalar_prefetch=0,
        grid=(Ep // tile_e,),
        in_specs=[
            pl.BlockSpec((Np, Dp), full),        # x (bf16, full-resident)
            pl.BlockSpec((tile_e, Dp), edge),    # edge_attr tile
            pl.BlockSpec((tile_e, 1), edge),     # row tile
            pl.BlockSpec((tile_e, 1), edge),     # col tile
            pl.BlockSpec((Np, 1), full),         # 1/count per node (f32)
            pl.BlockSpec((Dp, Dp), full),        # w1 (x half)
            pl.BlockSpec((Dp, Dp), full),        # w1 (edge half)
            pl.BlockSpec((1, Dp), full),         # b1a
            pl.BlockSpec((Dp, Dp), full),        # w1b
            pl.BlockSpec((1, Dp), full),         # b1b
            pl.BlockSpec((Dp, Dp), full),        # w2 (x half)
            pl.BlockSpec((Dp, Dp), full),        # w2 (mean half)
            pl.BlockSpec((1, Dp), full),         # b2a
            pl.BlockSpec((Dp, Dp), full),        # w2b
            pl.BlockSpec((1, Dp), full),         # b2b
        ],
        out_specs=pl.BlockSpec((Np, Dp), full),
        scratch_shapes=[pltpu.VMEM((Np, Dp), jnp.float32)],   # full accumulator
    )

    # Generation-aware VMEM budget: ~96 MiB on v5e/v6e (128 MiB physical),
    # ~48 MiB on v7x (64 MiB physical).
    try:
        vmem_cap = int(pltpu.get_tpu_info().vmem_capacity_bytes)
    except Exception:
        vmem_cap = 64 * 1024 * 1024
    vmem_limit = max(32 * 1024 * 1024,
                     min(vmem_cap * 3 // 4, 100 * 1024 * 1024))

    out = pl.pallas_call(
        node_model_kernel,
        out_shape=jax.ShapeDtypeStruct((Np, Dp), jnp.bfloat16),
        grid_spec=grid_spec,
        compiler_params=pltpu.CompilerParams(
            dimension_semantics=("arbitrary",),
            vmem_limit_bytes=int(vmem_limit),
        ),
    )(x_p, ea_p, row_p, col_p, inv_p,
      w1x, w1e, b1a_p, w1b_p, b1b_p,
      w2x, w2m, b2a_p, w2b_p, b2b_p)
    return out[:N, :D].astype(jnp.float32)


def node_model_ref(x, edge_index, edge_attr, params):
    """Pure-JAX f32 reference mirroring the torch forward pass."""
    w1a, b1a, w1b, b1b, w2a, b2a, w2b, b2b = params
    row, col = edge_index
    N = x.shape[0]
    out = jnp.concatenate([x[row], edge_attr], axis=1)
    out = jnp.maximum(out @ w1a + b1a, 0.0) @ w1b + b1b
    seg_sum = jax.ops.segment_sum(out, col, num_segments=N)
    counts = jax.ops.segment_sum(jnp.ones((out.shape[0],), jnp.float32), col,
                                 num_segments=N)
    mean = seg_sum / jnp.maximum(counts, 1.0)[:, None]
    out2 = jnp.concatenate([x, mean], axis=1)
    return jnp.maximum(out2 @ w2a + b2a, 0.0) @ w2b + b2b


if __name__ == "__main__":
    # Small shapes consistent with the module (in_dim // div = feature width).
    in_dim, div = 32, 1
    D = in_dim // div
    N, E = 16, 40

    key = jax.random.PRNGKey(0)
    keys = jax.random.split(key, 8)
    x = jax.random.normal(keys[0], (N, D), jnp.float32)
    edge_attr = jax.random.normal(keys[1], (E, D), jnp.float32)
    row = jax.random.randint(keys[2], (E,), 0, N, jnp.int32)
    col = jax.random.randint(keys[3], (E,), 0, N, jnp.int32)
    edge_index = jnp.stack([row, col], axis=0)   # (2, E)

    def init_lin(k, fan_in, fan_out):
        bound = 1.0 / float(fan_in) ** 0.5
        kw, kb = jax.random.split(k)
        w = jax.random.uniform(kw, (fan_in, fan_out), jnp.float32, -bound, bound)
        b = jax.random.uniform(kb, (fan_out,), jnp.float32, -bound, bound)
        return w, b

    w1a, b1a = init_lin(keys[4], 2 * D, D)
    w1b, b1b = init_lin(keys[5], D, D)
    w2a, b2a = init_lin(keys[6], 2 * D, D)
    w2b, b2b = init_lin(keys[7], D, D)
    params = (w1a, b1a, w1b, b1b, w2a, b2a, w2b, b2b)

    ref = node_model_ref(x, edge_index, edge_attr, params)

    # Multi-tile path: tile_e=16 -> 3 edge tiles (exercises init / accumulate /
    # finalize and padded-edge masking).
    out_small = node_model(x, edge_index, edge_attr, params, tile_e=16)
    jax.block_until_ready(out_small)
    assert out_small.shape == (N, D)
    assert jnp.allclose(out_small, ref, atol=5e-2, rtol=5e-2), \
        "Pallas kernel mismatch vs reference (tile_e=16)"

    # Default (large-tile) path: tile_e clamps to round_up(E, 16) -> 1 tile.
    out_big = node_model(x, edge_index, edge_attr, params)
    jax.block_until_ready(out_big)
    assert jnp.allclose(out_big, ref, atol=5e-2, rtol=5e-2), \
        "Pallas kernel mismatch vs reference (default tiles)"

    print("KERNEL_OK")
</pallas_src>

<mosaic_0001>
module attributes {stable_mosaic.version = 11 : i64} {
  func.func @node_model_kernel(%arg0: i32, %arg1: memref<128x128xbf16, #tpu.memory_space<vmem>>, %arg2: memref<16x128xbf16, #tpu.memory_space<vmem>>, %arg3: memref<16x1xi32, #tpu.memory_space<vmem>>, %arg4: memref<16x1xi32, #tpu.memory_space<vmem>>, %arg5: memref<128x1xf32, #tpu.memory_space<vmem>>, %arg6: memref<128x128xbf16, #tpu.memory_space<vmem>>, %arg7: memref<128x128xbf16, #tpu.memory_space<vmem>>, %arg8: memref<1x128xf32, #tpu.memory_space<vmem>>, %arg9: memref<128x128xbf16, #tpu.memory_space<vmem>>, %arg10: memref<1x128xf32, #tpu.memory_space<vmem>>, %arg11: memref<128x128xbf16, #tpu.memory_space<vmem>>, %arg12: memref<128x128xbf16, #tpu.memory_space<vmem>>, %arg13: memref<1x128xf32, #tpu.memory_space<vmem>>, %arg14: memref<128x128xbf16, #tpu.memory_space<vmem>>, %arg15: memref<1x128xf32, #tpu.memory_space<vmem>>, %arg16: memref<128x128xbf16, #tpu.memory_space<vmem>>, %arg17: memref<128x128xf32, #tpu.memory_space<vmem>>) attributes {dimension_semantics = [#tpu.dimension_semantics<arbitrary>], iteration_bounds = array<i64: 3>, scalar_prefetch = 0 : i64, scratch_operands = 1 : i64, tpu.core_type = #tpu.core_type<tc>, window_params = [{pipeline_mode = #tpu.pipeline_mode<synchronous>, transform_indices = @transform_0, window_bounds = array<i64: 128, 128>}, {transform_indices = @transform_1, window_bounds = array<i64: 16, 128>}, {transform_indices = @transform_2, window_bounds = array<i64: 16, 1>}, {transform_indices = @transform_3, window_bounds = array<i64: 16, 1>}, {pipeline_mode = #tpu.pipeline_mode<synchronous>, transform_indices = @transform_4, window_bounds = array<i64: 128, 1>}, {pipeline_mode = #tpu.pipeline_mode<synchronous>, transform_indices = @transform_5, window_bounds = array<i64: 128, 128>}, {pipeline_mode = #tpu.pipeline_mode<synchronous>, transform_indices = @transform_6, window_bounds = array<i64: 128, 128>}, {pipeline_mode = #tpu.pipeline_mode<synchronous>, transform_indices = @transform_7, window_bounds = array<i64: 1, 128>}, {pipeline_mode = #tpu.pipeline_mode<synchronous>, transform_indices = @transform_8, window_bounds = array<i64: 128, 128>}, {pipeline_mode = #tpu.pipeline_mode<synchronous>, transform_indices = @transform_9, window_bounds = array<i64: 1, 128>}, {pipeline_mode = #tpu.pipeline_mode<synchronous>, transform_indices = @transform_10, window_bounds = array<i64: 128, 128>}, {pipeline_mode = #tpu.pipeline_mode<synchronous>, transform_indices = @transform_11, window_bounds = array<i64: 128, 128>}, {pipeline_mode = #tpu.pipeline_mode<synchronous>, transform_indices = @transform_12, window_bounds = array<i64: 1, 128>}, {pipeline_mode = #tpu.pipeline_mode<synchronous>, transform_indices = @transform_13, window_bounds = array<i64: 128, 128>}, {pipeline_mode = #tpu.pipeline_mode<synchronous>, transform_indices = @transform_14, window_bounds = array<i64: 1, 128>}, {pipeline_mode = #tpu.pipeline_mode<synchronous>, transform_indices = @transform_15, window_bounds = array<i64: 128, 128>}]} {
    %c0_i32 = arith.constant 0 : i32
    %0 = arith.cmpi eq, %arg0, %c0_i32 : i32
    %1 = arith.extui %0 : i1 to i32
    %c0_i32_0 = arith.constant 0 : i32
    %2 = arith.cmpi ne, %1, %c0_i32_0 : i32
    scf.if %2 {
      %cst_28 = arith.constant 0.000000e+00 : f32
      %44 = vector.broadcast %cst_28 : f32 to vector<128x128xf32>
      %c0_29 = arith.constant 0 : index
      %c0_30 = arith.constant 0 : index
      %45 = vector.load %arg17[%c0_29, %c0_30] : memref<128x128xf32, #tpu.memory_space<vmem>>, vector<128x128xf32>
      tpu.vector_store %arg17[%c0_29, %c0_30], %44 {strides = array<i32>} : memref<128x128xf32, #tpu.memory_space<vmem>>, vector<128x128xf32>,
    } else {
    }
    %c0 = arith.constant 0 : index
    %c0_1 = arith.constant 0 : index
    %3 = vector.load %arg3[%c0, %c0_1] : memref<16x1xi32, #tpu.memory_space<vmem>>, vector<16x1xi32>
    %c0_2 = arith.constant 0 : index
    %c0_3 = arith.constant 0 : index
    %4 = vector.load %arg4[%c0_2, %c0_3] : memref<16x1xi32, #tpu.memory_space<vmem>>, vector<16x1xi32>
    %5 = tpu.iota {dimensions = array<i32: 1>} : vector<16x128xi32>
    %6 = vector.broadcast %3 : vector<16x1xi32> to vector<16x128xi32>
    %7 = arith.cmpi eq, %5, %6 : vector<16x128xi32>
    %8 = arith.extui %7 : vector<16x128xi1> to vector<16x128xi32>
    %9 = arith.sitofp %8 : vector<16x128xi32> to vector<16x128xf32>
    %10 = arith.truncf %9 : vector<16x128xf32> to vector<16x128xbf16>
    %c0_4 = arith.constant 0 : index
    %c0_5 = arith.constant 0 : index
    %11 = vector.load %arg1[%c0_4, %c0_5] : memref<128x128xbf16, #tpu.memory_space<vmem>>, vector<128x128xbf16>
    %cst = arith.constant dense<0.000000e+00> : vector<16x128xf32>
    %12 = tpu.matmul %10, %11, %cst {dimension_numbers = #tpu.dot_dimension_numbers<[1], [0], [0], [1], [0, 0, 1, 1], [], []>} : vector<16x128xbf16>, vector<128x128xbf16>, vector<16x128xf32> -> vector<16x128xf32>
    %13 = arith.truncf %12 : vector<16x128xf32> to vector<16x128xbf16>
    %c0_6 = arith.constant 0 : index
    %c0_7 = arith.constant 0 : index
    %14 = vector.load %arg6[%c0_6, %c0_7] : memref<128x128xbf16, #tpu.memory_space<vmem>>, vector<128x128xbf16>
    %cst_8 = arith.constant dense<0.000000e+00> : vector<16x128xf32>
    %15 = tpu.matmul %13, %14, %cst_8 {dimension_numbers = #tpu.dot_dimension_numbers<[1], [0], [0], [1], [0, 0, 1, 1], [], []>} : vector<16x128xbf16>, vector<128x128xbf16>, vector<16x128xf32> -> vector<16x128xf32>
    %c0_9 = arith.constant 0 : index
    %c0_10 = arith.constant 0 : index
    %16 = vector.load %arg2[%c0_9, %c0_10] : memref<16x128xbf16, #tpu.memory_space<vmem>>, vector<16x128xbf16>
    %c0_11 = arith.constant 0 : index
    %c0_12 = arith.constant 0 : index
    %17 = vector.load %arg7[%c0_11, %c0_12] : memref<128x128xbf16, #tpu.memory_space<vmem>>, vector<128x128xbf16>
    %cst_13 = arith.constant dense<0.000000e+00> : vector<16x128xf32>
    %18 = tpu.matmul %16, %17, %cst_13 {dimension_numbers = #tpu.dot_dimension_numbers<[1], [0], [0], [1], [0, 0, 1, 1], [], []>} : vector<16x128xbf16>, vector<128x128xbf16>, vector<16x128xf32> -> vector<16x128xf32>
    %19 = arith.addf %15, %18 : vector<16x128xf32>
    %c0_14 = arith.constant 0 : index
    %c0_15 = arith.constant 0 : index
    %20 = vector.load %arg8[%c0_14, %c0_15] : memref<1x128xf32, #tpu.memory_space<vmem>>, vector<1x128xf32>
    %21 = vector.broadcast %20 : vector<1x128xf32> to vector<16x128xf32>
    %22 = arith.addf %19, %21 : vector<16x128xf32>
    %cst_16 = arith.constant 0.000000e+00 : f32
    %23 = vector.broadcast %cst_16 : f32 to vector<16x128xf32>
    %24 = arith.maximumf %22, %23 : vector<16x128xf32>
    %25 = arith.truncf %24 : vector<16x128xf32> to vector<16x128xbf16>
    %c0_17 = arith.constant 0 : index
    %c0_18 = arith.constant 0 : index
    %26 = vector.load %arg9[%c0_17, %c0_18] : memref<128x128xbf16, #tpu.memory_space<vmem>>, vector<128x128xbf16>
    %cst_19 = arith.constant dense<0.000000e+00> : vector<16x128xf32>
    %27 = tpu.matmul %25, %26, %cst_19 {dimension_numbers = #tpu.dot_dimension_numbers<[1], [0], [0], [1], [0, 0, 1, 1], [], []>} : vector<16x128xbf16>, vector<128x128xbf16>, vector<16x128xf32> -> vector<16x128xf32>
    %c0_20 = arith.constant 0 : index
    %c0_21 = arith.constant 0 : index
    %28 = vector.load %arg10[%c0_20, %c0_21] : memref<1x128xf32, #tpu.memory_space<vmem>>, vector<1x128xf32>
    %29 = vector.broadcast %28 : vector<1x128xf32> to vector<16x128xf32>
    %30 = arith.addf %27, %29 : vector<16x128xf32>
    %31 = vector.broadcast %4 : vector<16x1xi32> to vector<16x128xi32>
    %32 = arith.cmpi eq, %5, %31 : vector<16x128xi32>
    %33 = arith.extui %32 : vector<16x128xi1> to vector<16x128xi32>
    %34 = arith.sitofp %33 : vector<16x128xi32> to vector<16x128xf32>
    %35 = arith.truncf %34 : vector<16x128xf32> to vector<16x128xbf16>
    %c0_22 = arith.constant 0 : index
    %c0_23 = arith.constant 0 : index
    %36 = vector.load %arg17[%c0_22, %c0_23] : memref<128x128xf32, #tpu.memory_space<vmem>>, vector<128x128xf32>
    %37 = arith.truncf %30 : vector<16x128xf32> to vector<16x128xbf16>
    %cst_24 = arith.constant dense<0.000000e+00> : vector<128x128xf32>
    %38 = tpu.matmul %35, %37, %cst_24 {dimension_numbers = #tpu.dot_dimension_numbers<[0], [0], [1], [1], [0, 1, 1, 1], [], []>} : vector<16x128xbf16>, vector<16x128xbf16>, vector<128x128xf32> -> vector<128x128xf32>
    %39 = arith.addf %36, %38 : vector<128x128xf32>
    %c0_25 = arith.constant 0 : index
    %c0_26 = arith.constant 0 : index
    %40 = vector.load %arg17[%c0_25, %c0_26] : memref<128x128xf32, #tpu.memory_space<vmem>>, vector<128x128xf32>
    tpu.vector_store %arg17[%c0_25, %c0_26], %39 {strides = array<i32>} : memref<128x128xf32, #tpu.memory_space<vmem>>, vector<128x128xf32>,
    %c2_i32 = arith.constant 2 : i32
    %41 = arith.cmpi eq, %arg0, %c2_i32 : i32
    %42 = arith.extui %41 : i1 to i32
    %c0_i32_27 = arith.constant 0 : i32
    %43 = arith.cmpi ne, %42, %c0_i32_27 : i32
    scf.if %43 {
      %c0_28 = arith.constant 0 : index
      %c0_29 = arith.constant 0 : index
      %44 = vector.load %arg17[%c0_28, %c0_29] : memref<128x128xf32, #tpu.memory_space<vmem>>, vector<128x128xf32>
      %c0_30 = arith.constant 0 : index
      %c0_31 = arith.constant 0 : index
      %45 = vector.load %arg5[%c0_30, %c0_31] : memref<128x1xf32, #tpu.memory_space<vmem>>, vector<128x1xf32>
      %46 = vector.broadcast %45 : vector<128x1xf32> to vector<128x128xf32>
      %47 = arith.mulf %44, %46 : vector<128x128xf32>
      %c0_32 = arith.constant 0 : index
      %c0_33 = arith.constant 0 : index
      %48 = vector.load %arg1[%c0_32, %c0_33] : memref<128x128xbf16, #tpu.memory_space<vmem>>, vector<128x128xbf16>
      %c0_34 = arith.constant 0 : index
      %c0_35 = arith.constant 0 : index
      %49 = vector.load %arg11[%c0_34, %c0_35] : memref<128x128xbf16, #tpu.memory_space<vmem>>, vector<128x128xbf16>
      %cst_36 = arith.constant dense<0.000000e+00> : vector<128x128xf32>
      %50 = tpu.matmul %48, %49, %cst_36 {dimension_numbers = #tpu.dot_dimension_numbers<[1], [0], [0], [1], [0, 0, 1, 1], [], []>} : vector<128x128xbf16>, vector<128x128xbf16>, vector<128x128xf32> -> vector<128x128xf32>
      %51 = arith.truncf %47 : vector<128x128xf32> to vector<128x128xbf16>
      %c0_37 = arith.constant 0 : index
      %c0_38 = arith.constant 0 : index
      %52 = vector.load %arg12[%c0_37, %c0_38] : memref<128x128xbf16, #tpu.memory_space<vmem>>, vector<128x128xbf16>
      %cst_39 = arith.constant dense<0.000000e+00> : vector<128x128xf32>
      %53 = tpu.matmul %51, %52, %cst_39 {dimension_numbers = #tpu.dot_dimension_numbers<[1], [0], [0], [1], [0, 0, 1, 1], [], []>} : vector<128x128xbf16>, vector<128x128xbf16>, vector<128x128xf32> -> vector<128x128xf32>
      %54 = arith.addf %50, %53 : vector<128x128xf32>
      %c0_40 = arith.constant 0 : index
      %c0_41 = arith.constant 0 : index
      %55 = vector.load %arg13[%c0_40, %c0_41] : memref<1x128xf32, #tpu.memory_space<vmem>>, vector<1x128xf32>
      %56 = vector.broadcast %55 : vector<1x128xf32> to vector<128x128xf32>
      %57 = arith.addf %54, %56 : vector<128x128xf32>
      %cst_42 = arith.constant 0.000000e+00 : f32
      %58 = vector.broadcast %cst_42 : f32 to vector<128x128xf32>
      %59 = arith.maximumf %57, %58 : vector<128x128xf32>
      %60 = arith.truncf %59 : vector<128x128xf32> to vector<128x128xbf16>
      %c0_43 = arith.constant 0 : index
      %c0_44 = arith.constant 0 : index
      %61 = vector.load %arg14[%c0_43, %c0_44] : memref<128x128xbf16, #tpu.memory_space<vmem>>, vector<128x128xbf16>
      %cst_45 = arith.constant dense<0.000000e+00> : vector<128x128xf32>
      %62 = tpu.matmul %60, %61, %cst_45 {dimension_numbers = #tpu.dot_dimension_numbers<[1], [0], [0], [1], [0, 0, 1, 1], [], []>} : vector<128x128xbf16>, vector<128x128xbf16>, vector<128x128xf32> -> vector<128x128xf32>
      %c0_46 = arith.constant 0 : index
      %c0_47 = arith.constant 0 : index
      %63 = vector.load %arg15[%c0_46, %c0_47] : memref<1x128xf32, #tpu.memory_space<vmem>>, vector<1x128xf32>
      %64 = vector.broadcast %63 : vector<1x128xf32> to vector<128x128xf32>
      %65 = arith.addf %62, %64 : vector<128x128xf32>
      %66 = arith.truncf %65 : vector<128x128xf32> to vector<128x128xbf16>
      %c0_48 = arith.constant 0 : index
      %c0_49 = arith.constant 0 : index
      %67 = vector.load %arg16[%c0_48, %c0_49] : memref<128x128xbf16, #tpu.memory_space<vmem>>, vector<128x128xbf16>
      tpu.vector_store %arg16[%c0_48, %c0_49], %66 {strides = array<i32>} : memref<128x128xbf16, #tpu.memory_space<vmem>>, vector<128x128xbf16>,
    } else {
    }
    return
  }
  func.func @transform_0(%arg0: i32) -> (i32, i32) {
    %c0_i32 = arith.constant 0 : i32
    %c0_i32_0 = arith.constant 0 : i32
    %c0_i32_1 = arith.constant 0 : i32
    return %c0_i32, %c0_i32_0 : i32, i32
  }
  func.func @transform_1(%arg0: i32) -> (i32, i32) {
    %c0_i32 = arith.constant 0 : i32
    %c0_i32_0 = arith.constant 0 : i32
    return %arg0, %c0_i32 : i32, i32
  }
  func.func @transform_2(%arg0: i32) -> (i32, i32) {
    %c0_i32 = arith.constant 0 : i32
    %c0_i32_0 = arith.constant 0 : i32
    return %arg0, %c0_i32 : i32, i32
  }
  func.func @transform_3(%arg0: i32) -> (i32, i32) {
    %c0_i32 = arith.constant 0 : i32
    %c0_i32_0 = arith.constant 0 : i32
    return %arg0, %c0_i32 : i32, i32
  }
  func.func @transform_4(%arg0: i32) -> (i32, i32) {
    %c0_i32 = arith.constant 0 : i32
    %c0_i32_0 = arith.constant 0 : i32
    %c0_i32_1 = arith.constant 0 : i32
    return %c0_i32, %c0_i32_0 : i32, i32
  }
  func.func @transform_5(%arg0: i32) -> (i32, i32) {
    %c0_i32 = arith.constant 0 : i32
    %c0_i32_0 = arith.constant 0 : i32
    %c0_i32_1 = arith.constant 0 : i32
    return %c0_i32, %c0_i32_0 : i32, i32
  }
  func.func @transform_6(%arg0: i32) -> (i32, i32) {
    %c0_i32 = arith.constant 0 : i32
    %c0_i32_0 = arith.constant 0 : i32
    %c0_i32_1 = arith.constant 0 : i32
    return %c0_i32, %c0_i32_0 : i32, i32
  }
  func.func @transform_7(%arg0: i32) -> (i32, i32) {
    %c0_i32 = arith.constant 0 : i32
    %c0_i32_0 = arith.constant 0 : i32
    %c0_i32_1 = arith.constant 0 : i32
    return %c0_i32, %c0_i32_0 : i32, i32
  }
  func.func @transform_8(%arg0: i32) -> (i32, i32) {
    %c0_i32 = arith.constant 0 : i32
    %c0_i32_0 = arith.constant 0 : i32
    %c0_i32_1 = arith.constant 0 : i32
    return %c0_i32, %c0_i32_0 : i32, i32
  }
  func.func @transform_9(%arg0: i32) -> (i32, i32) {
    %c0_i32 = arith.constant 0 : i32
    %c0_i32_0 = arith.constant 0 : i32
    %c0_i32_1 = arith.constant 0 : i32
    return %c0_i32, %c0_i32_0 : i32, i32
  }
  func.func @transform_10(%arg0: i32) -> (i32, i32) {
    %c0_i32 = arith.constant 0 : i32
    %c0_i32_0 = arith.constant 0 : i32
    %c0_i32_1 = arith.constant 0 : i32
    return %c0_i32, %c0_i32_0 : i32, i32
  }
  func.func @transform_11(%arg0: i32) -> (i32, i32) {
    %c0_i32 = arith.constant 0 : i32
    %c0_i32_0 = arith.constant 0 : i32
    %c0_i32_1 = arith.constant 0 : i32
    return %c0_i32, %c0_i32_0 : i32, i32
  }
  func.func @transform_12(%arg0: i32) -> (i32, i32) {
    %c0_i32 = arith.constant 0 : i32
    %c0_i32_0 = arith.constant 0 : i32
    %c0_i32_1 = arith.constant 0 : i32
    return %c0_i32, %c0_i32_0 : i32, i32
  }
  func.func @transform_13(%arg0: i32) -> (i32, i32) {
    %c0_i32 = arith.constant 0 : i32
    %c0_i32_0 = arith.constant 0 : i32
    %c0_i32_1 = arith.constant 0 : i32
    return %c0_i32, %c0_i32_0 : i32, i32
  }
  func.func @transform_14(%arg0: i32) -> (i32, i32) {
    %c0_i32 = arith.constant 0 : i32
    %c0_i32_0 = arith.constant 0 : i32
    %c0_i32_1 = arith.constant 0 : i32
    return %c0_i32, %c0_i32_0 : i32, i32
  }
  func.func @transform_15(%arg0: i32) -> (i32, i32) {
    %c0_i32 = arith.constant 0 : i32
    %c0_i32_0 = arith.constant 0 : i32
    %c0_i32_1 = arith.constant 0 : i32
    return %c0_i32, %c0_i32_0 : i32, i32
  }
}

</mosaic_0001>

<llo_original>
// kernel: tpu_custom_call.1
$region0: #{tpu_custom_call.1}
  #allocation0 [shape = 'u32[]', space=smem, size = 0x4, offset = 0x4, fixed_abs, tag = 'smem constant byte address 0x4 - core index']
  #allocation1 [shape = 'u32[72,128]{1,0:T(1,128)}', space=vmem, size = 0x9000, scoped, tag = 'internal scratch']
  #allocation2 [shape = 'f32[128,128]{1,0:T(8,128)}', space=vmem, size = 0x10000, scoped, tag = 'scratch operand']
  %s0 = inlined_call_operand.vmem [shape: bf16[128,128], index: 0, kind: input, shape index: {}]
  %s1 = inlined_call_operand.vmem [shape: bf16[48,128], index: 1, kind: input, shape index: {}]
  %s2 = inlined_call_operand.vmem [shape: s32[48,1], index: 2, kind: input, shape index: {}]
  %s3 = inlined_call_operand.vmem [shape: s32[48,1], index: 3, kind: input, shape index: {}]
  %s4 = inlined_call_operand.vmem [shape: f32[128,1], index: 4, kind: input, shape index: {}]
  %s5 = inlined_call_operand.vmem [shape: bf16[128,128], index: 5, kind: input, shape index: {}]
  %s6 = inlined_call_operand.vmem [shape: bf16[128,128], index: 6, kind: input, shape index: {}]
  %s7 = inlined_call_operand.vmem [shape: f32[1,128], index: 7, kind: input, shape index: {}]
  %s8 = inlined_call_operand.hbm [shape: bf16[128,128], index: 8, kind: input, shape index: {}]
  %s9 = inlined_call_operand.vmem [shape: f32[1,128], index: 9, kind: input, shape index: {}]
  %s10 = inlined_call_operand.hbm [shape: bf16[128,128], index: 10, kind: input, shape index: {}]
  %s11 = inlined_call_operand.hbm [shape: bf16[128,128], index: 11, kind: input, shape index: {}]
  %s12 = inlined_call_operand.vmem [shape: f32[1,128], index: 12, kind: input, shape index: {}]
  %s13 = inlined_call_operand.hbm [shape: bf16[128,128], index: 13, kind: input, shape index: {}]
  %s14 = inlined_call_operand.vmem [shape: f32[1,128], index: 14, kind: input, shape index: {}]
  %s15 = inlined_call_operand.hbm [shape: bf16[128,128], index: 15, kind: output, shape index: {}]
  %s16 = sld [smem:[#allocation0]]
  $region117: #{tpu_custom_call.1} parent=0
    _
  %s18 = ssub.s32 1, %s16
  %s19 = scalar_select 0, %s18, %s16
  $region1: #{tpu_custom_call.1} parent=0
    #allocation3 [shape = 'u8[32768]{0}', space=vmem, size = 0x8000, scoped, tag = 'input window, operand 8, single buffered']
    #allocation4 [shape = 's32[2]{0}', space=sflag, size = 0x8, scoped, tag = 'scoped memory for tpu_custom_call.1']
    #allocation5 [shape = 's32[2]{0}', space=sflag, size = 0x8, scoped, tag = 'scoped memory for tpu_custom_call.1']
    #allocation6 [shape = 'u8[32768]{0}', space=vmem, size = 0x8000, scoped, tag = 'input window, operand 10, single buffered']
    #allocation7 [shape = 's32[1]{0}', space=sflag, size = 0x4, scoped, tag = 'scoped memory for tpu_custom_call.1']
    #allocation8 [shape = 'u8[32768]{0}', space=vmem, size = 0x8000, scoped, tag = 'input window, operand 11, single buffered']
    #allocation9 [shape = 'u8[32768]{0}', space=vmem, size = 0x8000, scoped, tag = 'input window, operand 13, single buffered']
    #allocation10 [shape = 's32[1]{0}', space=sflag, size = 0x4, scoped, tag = 'scoped memory for tpu_custom_call.1']
    #allocation11 [shape = 'u8[32768]{0}', space=vmem, size = 0x8000, scoped, tag = 'output window, operand 0, single buffered']
    %20 = vsyncpa [#allocation4], 0
    %21 = vsyncpa [#allocation7], 0
    %22 = vsyncpa [#allocation10], 0
    %23 = vsyncpa [#allocation5], 0
    loop: start=0, step=1, limit=5
    $region2: #{tpu_custom_call.1} parent=1 // loop_pre_header
      _
    $region3: #{tpu_custom_call.1} parent=1 // loop_header
      %s25 = sphi 0, %s29
      %p26 = scmp.ge.s32.totalorder %s25, 5
      %s33 = sphi 0, %s33
      %s35 = sphi 0, %s33
      %s36 = sphi 0, %s35
      %s50 = sphi 0, %s36
      %s56 = sphi 0, %s58
      %s59 = sphi 0, %s56
      %s60 = sphi 0, %s59
      %s76 = sphi 0, %s60
      %s82 = sphi 0, %s84
      %s85 = sphi 0, %s82
      %s86 = sphi 0, %s85
      %s102 = sphi 0, %s86
      %s108 = sphi 0, %s110
      %s111 = sphi 0, %s108
      %s112 = sphi 0, %s111
      %s128 = sphi 0, %s112
      %s132 = sphi 0, %s132
      %s134 = sphi 0, %s132
      %s135 = sphi 0, %s134
      %s149 = sphi 0, %s135
      %s153 = sphi 0, %s153
      %s155 = sphi 0, %s153
      %s156 = sphi 0, %s155
      %s170 = sphi 0, %s156
      %s174 = sphi 0, %s174
      %s176 = sphi 0, %s174
      %s177 = sphi 0, %s176
      %s191 = sphi 0, %s177
      %s195 = sphi 0, %s195
      %s197 = sphi 0, %s195
      %s198 = sphi 0, %s197
      %s212 = sphi 0, %s198
      %s216 = sphi 0, %s216
      %s218 = sphi 0, %s216
      %s219 = sphi 0, %s218
      %s233 = sphi 0, %s219
      %s237 = sphi 0, %s237
      %s239 = sphi 0, %s237
      %s240 = sphi 0, %s239
      %s254 = sphi 0, %s240
      %s258 = sphi 0, %s258
      %s260 = sphi 0, %s258
      %s261 = sphi 0, %s260
      %s275 = sphi 0, %s261
      %s279 = sphi 0, %s279
      %s281 = sphi 0, %s279
      %s282 = sphi 0, %s281
      %s296 = sphi 0, %s282
      %s300 = sphi 0, %s300
      %s302 = sphi 0, %s300
      %s303 = sphi 0, %s302
      %s317 = sphi 0, %s303
      %s321 = sphi 0, %s321
      %s323 = sphi 0, %s321
      %s324 = sphi 0, %s323
      %s338 = sphi 0, %s324
      %s342 = sphi 0, %s342
      %s344 = sphi 0, %s342
      %s345 = sphi 0, %s344
      %s359 = sphi 0, %s345
      %s363 = sphi 0, %s363
      %s365 = sphi 0, %s363
      %s366 = sphi 0, %s365
      %s380 = sphi 0, %s366
    $region4: #{tpu_custom_call.1} parent=1 // loop_header_branch
      %28 = sbr.rel (%p26) target = $region8
    $region5: #{tpu_custom_call.1} parent=1 // loop_body
      %s30 = ssub.s32 %s25, 1
      %s31 = ssub.s32 %s25, 2
      %s32 = sadd.s32 %s25, 1
      %s34 = sadd.s32 %s33, 1
      %p37 = scmp.eq.s32.totalorder %s25, 2
      %p38 = scmp.ne.s32.totalorder %s33, %s35
      %p39 = scmp.eq.s32.totalorder %s25, 0
      %p40 = por %p38, %p39
      %p41 = scmp.ne.s32.totalorder %s33, %s35
      %p42 = scmp.eq.s32.totalorder %s30, 2
      %p43 = por %p41, %p42
      %p44 = scmp.ne.s32.totalorder %s35, %s36
      %p45 = scmp.eq.s32.totalorder %s30, 0
      %p46 = por %p44, %p45
      %p47 = scmp.ne.s32.totalorder %s35, %s36
      %p48 = scmp.eq.s32.totalorder %s31, 2
      %p49 = por %p47, %p48
      %p51 = scmp.ne.s32.totalorder %s36, %s50
      %p52 = scmp.eq.s32.totalorder %s31, 0
      %p53 = por %p51, %p52
      %s54 = ssub.s32 %s25, %s32
      %p55 = scmp.eq.s32.totalorder %s54, 0
      %s57 = sadd.s32 %s56, 1
      %s58 = scalar_select %p55, %s56, %s57
      %p61 = pneg %p55
      %p62 = scmp.eq.s32.totalorder %s25, 2
      %p63 = por %p61, %p62
      %p64 = scmp.ne.s32.totalorder %s56, %s59
      %p65 = scmp.eq.s32.totalorder %s25, 0
      %p66 = por %p64, %p65
      %p67 = scmp.ne.s32.totalorder %s56, %s59
      %p68 = scmp.eq.s32.totalorder %s30, 2
      %p69 = por %p67, %p68
      %p70 = scmp.ne.s32.totalorder %s59, %s60
      %p71 = scmp.eq.s32.totalorder %s30, 0
      %p72 = por %p70, %p71
      %p73 = scmp.ne.s32.totalorder %s59, %s60
      %p74 = scmp.eq.s32.totalorder %s31, 2
      %p75 = por %p73, %p74
      %p77 = scmp.ne.s32.totalorder %s60, %s76
      %p78 = scmp.eq.s32.totalorder %s31, 0
      %p79 = por %p77, %p78
      %s80 = ssub.s32 %s25, %s32
      %p81 = scmp.eq.s32.totalorder %s80, 0
      %s83 = sadd.s32 %s82, 1
      %s84 = scalar_select %p81, %s82, %s83
      %p87 = pneg %p81
      %p88 = scmp.eq.s32.totalorder %s25, 2
      %p89 = por %p87, %p88
      %p90 = scmp.ne.s32.totalorder %s82, %s85
      %p91 = scmp.eq.s32.totalorder %s25, 0
      %p92 = por %p90, %p91
      %p93 = scmp.ne.s32.totalorder %s82, %s85
      %p94 = scmp.eq.s32.totalorder %s30, 2
      %p95 = por %p93, %p94
      %p96 = scmp.ne.s32.totalorder %s85, %s86
      %p97 = scmp.eq.s32.totalorder %s30, 0
      %p98 = por %p96, %p97
      %p99 = scmp.ne.s32.totalorder %s85, %s86
      %p100 = scmp.eq.s32.totalorder %s31, 2
      %p101 = por %p99, %p100
      %p103 = scmp.ne.s32.totalorder %s86, %s102
      %p104 = scmp.eq.s32.totalorder %s31, 0
      %p105 = por %p103, %p104
      %s106 = ssub.s32 %s25, %s32
      %p107 = scmp.eq.s32.totalorder %s106, 0
      %s109 = sadd.s32 %s108, 1
      %s110 = scalar_select %p107, %s108, %s109
      %p113 = pneg %p107
      %p114 = scmp.eq.s32.totalorder %s25, 2
      %p115 = por %p113, %p114
      %p116 = scmp.ne.s32.totalorder %s108, %s111
      %p117 = scmp.eq.s32.totalorder %s25, 0
      %p118 = por %p116, %p117
      %p119 = scmp.ne.s32.totalorder %s108, %s111
      %p120 = scmp.eq.s32.totalorder %s30, 2
      %p121 = por %p119, %p120
      %p122 = scmp.ne.s32.totalorder %s111, %s112
      %p123 = scmp.eq.s32.totalorder %s30, 0
      %p124 = por %p122, %p123
      %p125 = scmp.ne.s32.totalorder %s111, %s112
      %p126 = scmp.eq.s32.totalorder %s31, 2
      %p127 = por %p125, %p126
      %p129 = scmp.ne.s32.totalorder %s112, %s128
      %p130 = scmp.eq.s32.totalorder %s31, 0
      %p131 = por %p129, %p130
      %s133 = sadd.s32 %s132, 1
      %p136 = scmp.eq.s32.totalorder %s25, 2
      %p137 = scmp.ne.s32.totalorder %s132, %s134
      %p138 = scmp.eq.s32.totalorder %s25, 0
      %p139 = por %p137, %p138
      %p140 = scmp.ne.s32.totalorder %s132, %s134
      %p141 = scmp.eq.s32.totalorder %s30, 2
      %p142 = por %p140, %p141
      %p143 = scmp.ne.s32.totalorder %s134, %s135
      %p144 = scmp.eq.s32.totalorder %s30, 0
      %p145 = por %p143, %p144
      %p146 = scmp.ne.s32.totalorder %s134, %s135
      %p147 = scmp.eq.s32.totalorder %s31, 2
      %p148 = por %p146, %p147
      %p150 = scmp.ne.s32.totalorder %s135, %s149
      %p151 = scmp.eq.s32.totalorder %s31, 0
      %p152 = por %p150, %p151
      %s154 = sadd.s32 %s153, 1
      %p157 = scmp.eq.s32.totalorder %s25, 2
      %p158 = scmp.ne.s32.totalorder %s153, %s155
      %p159 = scmp.eq.s32.totalorder %s25, 0
      %p160 = por %p158, %p159
      %p161 = scmp.ne.s32.totalorder %s153, %s155
      %p162 = scmp.eq.s32.totalorder %s30, 2
      %p163 = por %p161, %p162
      %p164 = scmp.ne.s32.totalorder %s155, %s156
      %p165 = scmp.eq.s32.totalorder %s30, 0
      %p166 = por %p164, %p165
      %p167 = scmp.ne.s32.totalorder %s155, %s156
      %p168 = scmp.eq.s32.totalorder %s31, 2
      %p169 = por %p167, %p168
      %p171 = scmp.ne.s32.totalorder %s156, %s170
      %p172 = scmp.eq.s32.totalorder %s31, 0
      %p173 = por %p171, %p172
      %s175 = sadd.s32 %s174, 1
      %p178 = scmp.eq.s32.totalorder %s25, 2
      %p179 = scmp.ne.s32.totalorder %s174, %s176
      %p180 = scmp.eq.s32.totalorder %s25, 0
      %p181 = por %p179, %p180
      %p182 = scmp.ne.s32.totalorder %s174, %s176
      %p183 = scmp.eq.s32.totalorder %s30, 2
      %p184 = por %p182, %p183
      %p185 = scmp.ne.s32.totalorder %s176, %s177
      %p186 = scmp.eq.s32.totalorder %s30, 0
      %p187 = por %p185, %p186
      %p188 = scmp.ne.s32.totalorder %s176, %s177
      %p189 = scmp.eq.s32.totalorder %s31, 2
      %p190 = por %p188, %p189
      %p192 = scmp.ne.s32.totalorder %s177, %s191
      %p193 = scmp.eq.s32.totalorder %s31, 0
      %p194 = por %p192, %p193
      %s196 = sadd.s32 %s195, 1
      %p199 = scmp.eq.s32.totalorder %s25, 2
      %p200 = scmp.ne.s32.totalorder %s195, %s197
      %p201 = scmp.eq.s32.totalorder %s25, 0
      %p202 = por %p200, %p201
      %p203 = scmp.ne.s32.totalorder %s195, %s197
      %p204 = scmp.eq.s32.totalorder %s30, 2
      %p205 = por %p203, %p204
      %p206 = scmp.ne.s32.totalorder %s197, %s198
      %p207 = scmp.eq.s32.totalorder %s30, 0
      %p208 = por %p206, %p207
      %p209 = scmp.ne.s32.totalorder %s197, %s198
      %p210 = scmp.eq.s32.totalorder %s31, 2
      %p211 = por %p209, %p210
      %p213 = scmp.ne.s32.totalorder %s198, %s212
      %p214 = scmp.eq.s32.totalorder %s31, 0
      %p215 = por %p213, %p214
      %s217 = sadd.s32 %s216, 1
      %p220 = scmp.eq.s32.totalorder %s25, 2
      %p221 = scmp.ne.s32.totalorder %s216, %s218
      %p222 = scmp.eq.s32.totalorder %s25, 0
      %p223 = por %p221, %p222
      %p224 = scmp.ne.s32.totalorder %s216, %s218
      %p225 = scmp.eq.s32.totalorder %s30, 2
      %p226 = por %p224, %p225
      %p227 = scmp.ne.s32.totalorder %s218, %s219
      %p228 = scmp.eq.s32.totalorder %s30, 0
      %p229 = por %p227, %p228
      %p230 = scmp.ne.s32.totalorder %s218, %s219
      %p231 = scmp.eq.s32.totalorder %s31, 2
      %p232 = por %p230, %p231
      %p234 = scmp.ne.s32.totalorder %s219, %s233
      %p235 = scmp.eq.s32.totalorder %s31, 0
      %p236 = por %p234, %p235
      %s238 = sadd.s32 %s237, 1
      %p241 = scmp.eq.s32.totalorder %s25, 2
      %p242 = scmp.ne.s32.totalorder %s237, %s239
      %p243 = scmp.eq.s32.totalorder %s25, 0
      %p244 = por %p242, %p243
      %p245 = scmp.ne.s32.totalorder %s237, %s239
      %p246 = scmp.eq.s32.totalorder %s30, 2
      %p247 = por %p245, %p246
      %p248 = scmp.ne.s32.totalorder %s239, %s240
      %p249 = scmp.eq.s32.totalorder %s30, 0
      %p250 = por %p248, %p249
      %p251 = scmp.ne.s32.totalorder %s239, %s240
      %p252 = scmp.eq.s32.totalorder %s31, 2
      %p253 = por %p251, %p252
      %p255 = scmp.ne.s32.totalorder %s240, %s254
      %p256 = scmp.eq.s32.totalorder %s31, 0
      %p257 = por %p255, %p256
      %s259 = sadd.s32 %s258, 1
      %p262 = scmp.eq.s32.totalorder %s25, 2
      %p263 = scmp.ne.s32.totalorder %s258, %s260
      %p264 = scmp.eq.s32.totalorder %s25, 0
      %p265 = por %p263, %p264
      %p266 = scmp.ne.s32.totalorder %s258, %s260
      %p267 = scmp.eq.s32.totalorder %s30, 2
      %p268 = por %p266, %p267
      %p269 = scmp.ne.s32.totalorder %s260, %s261
      %p270 = scmp.eq.s32.totalorder %s30, 0
      %p271 = por %p269, %p270
      %p272 = scmp.ne.s32.totalorder %s260, %s261
      %p273 = scmp.eq.s32.totalorder %s31, 2
      %p274 = por %p272, %p273
      %p276 = scmp.ne.s32.totalorder %s261, %s275
      %p277 = scmp.eq.s32.totalorder %s31, 0
      %p278 = por %p276, %p277
      %s280 = sadd.s32 %s279, 1
      %p283 = scmp.eq.s32.totalorder %s25, 2
      %p284 = scmp.ne.s32.totalorder %s279, %s281
      %p285 = scmp.eq.s32.totalorder %s25, 0
      %p286 = por %p284, %p285
      %p287 = scmp.ne.s32.totalorder %s279, %s281
      %p288 = scmp.eq.s32.totalorder %s30, 2
      %p289 = por %p287, %p288
      %p290 = scmp.ne.s32.totalorder %s281, %s282
      %p291 = scmp.eq.s32.totalorder %s30, 0
      %p292 = por %p290, %p291
      %p293 = scmp.ne.s32.totalorder %s281, %s282
      %p294 = scmp.eq.s32.totalorder %s31, 2
      %p295 = por %p293, %p294
      %p297 = scmp.ne.s32.totalorder %s282, %s296
      %p298 = scmp.eq.s32.totalorder %s31, 0
      %p299 = por %p297, %p298
      %s301 = sadd.s32 %s300, 1
      %p304 = scmp.eq.s32.totalorder %s25, 2
      %p305 = scmp.ne.s32.totalorder %s300, %s302
      %p306 = scmp.eq.s32.totalorder %s25, 0
      %p307 = por %p305, %p306
      %p308 = scmp.ne.s32.totalorder %s300, %s302
      %p309 = scmp.eq.s32.totalorder %s30, 2
      %p310 = por %p308, %p309
      %p311 = scmp.ne.s32.totalorder %s302, %s303
      %p312 = scmp.eq.s32.totalorder %s30, 0
      %p313 = por %p311, %p312
      %p314 = scmp.ne.s32.totalorder %s302, %s303
      %p315 = scmp.eq.s32.totalorder %s31, 2
      %p316 = por %p314, %p315
      %p318 = scmp.ne.s32.totalorder %s303, %s317
      %p319 = scmp.eq.s32.totalorder %s31, 0
      %p320 = por %p318, %p319
      %s322 = sadd.s32 %s321, 1
      %p325 = scmp.eq.s32.totalorder %s25, 2
      %p326 = scmp.ne.s32.totalorder %s321, %s323
      %p327 = scmp.eq.s32.totalorder %s25, 0
      %p328 = por %p326, %p327
      %p329 = scmp.ne.s32.totalorder %s321, %s323
      %p330 = scmp.eq.s32.totalorder %s30, 2
      %p331 = por %p329, %p330
      %p332 = scmp.ne.s32.totalorder %s323, %s324
      %p333 = scmp.eq.s32.totalorder %s30, 0
      %p334 = por %p332, %p333
      %p335 = scmp.ne.s32.totalorder %s323, %s324
      %p336 = scmp.eq.s32.totalorder %s31, 2
      %p337 = por %p335, %p336
      %p339 = scmp.ne.s32.totalorder %s324, %s338
      %p340 = scmp.eq.s32.totalorder %s31, 0
      %p341 = por %p339, %p340
      %s343 = sadd.s32 %s342, 1
      %p346 = scmp.eq.s32.totalorder %s25, 2
      %p347 = scmp.ne.s32.totalorder %s342, %s344
      %p348 = scmp.eq.s32.totalorder %s25, 0
      %p349 = por %p347, %p348
      %p350 = scmp.ne.s32.totalorder %s342, %s344
      %p351 = scmp.eq.s32.totalorder %s30, 2
      %p352 = por %p350, %p351
      %p353 = scmp.ne.s32.totalorder %s344, %s345
      %p354 = scmp.eq.s32.totalorder %s30, 0
      %p355 = por %p353, %p354
      %p356 = scmp.ne.s32.totalorder %s344, %s345
      %p357 = scmp.eq.s32.totalorder %s31, 2
      %p358 = por %p356, %p357
      %p360 = scmp.ne.s32.totalorder %s345, %s359
      %p361 = scmp.eq.s32.totalorder %s31, 0
      %p362 = por %p360, %p361
      %s364 = sadd.s32 %s363, 1
      %p367 = scmp.eq.s32.totalorder %s25, 2
      %p368 = scmp.ne.s32.totalorder %s363, %s365
      %p369 = scmp.eq.s32.totalorder %s25, 0
      %p370 = por %p368, %p369
      %p371 = scmp.ne.s32.totalorder %s363, %s365
      %p372 = scmp.eq.s32.totalorder %s30, 2
      %p373 = por %p371, %p372
      %p374 = scmp.ne.s32.totalorder %s365, %s366
      %p375 = scmp.eq.s32.totalorder %s30, 0
      %p376 = por %p374, %p375
      %p377 = scmp.ne.s32.totalorder %s365, %s366
      %p378 = scmp.eq.s32.totalorder %s31, 2
      %p379 = por %p377, %p378
      %p381 = scmp.ne.s32.totalorder %s366, %s380
      %p382 = scmp.eq.s32.totalorder %s31, 0
      %p383 = por %p381, %p382
      %p384 = scmp.le.s32.totalorder 1, %s25
      %p385 = scmp.lt.s32.totalorder %s25, 4
      %p386 = pnand %p384, %p385
      %p387 = pneg %p386
      // Predicated region
      $region9: #{tpu_custom_call.1} parent=5 // pred_check
        _
      $region10: #{tpu_custom_call.1} parent=5 // pred_check_branch
        %389 = sbr.rel (%p386) target = $region12
      $region11: #{tpu_custom_call.1} parent=5 // pred_region
        %s390 = ssub.s32 %s25, 1
        // Predicated region
        $region13: #{tpu_custom_call.1} parent=11 // pred_check
          %p391 = pneg %p46
        $region14: #{tpu_custom_call.1} parent=11 // pred_check_branch
          %393 = sbr.rel (%p391) target = $region16
        $region15: #{tpu_custom_call.1} parent=11 // pred_region
          _
        $region16: #{tpu_custom_call.1} parent=11 // pred_fallthru
          _
        // Predicated region
        $region17: #{tpu_custom_call.1} parent=11 // pred_check
          %p394 = pneg %p145
        $region18: #{tpu_custom_call.1} parent=11 // pred_check_branch
          %396 = sbr.rel (%p394) target = $region20
        $region19: #{tpu_custom_call.1} parent=11 // pred_region
          _
        $region20: #{tpu_custom_call.1} parent=11 // pred_fallthru
          _
        // Predicated region
        $region21: #{tpu_custom_call.1} parent=11 // pred_check
          %p397 = pneg %p166
        $region22: #{tpu_custom_call.1} parent=11 // pred_check_branch
          %399 = sbr.rel (%p397) target = $region24
        $region23: #{tpu_custom_call.1} parent=11 // pred_region
          _
        $region24: #{tpu_custom_call.1} parent=11 // pred_fallthru
          _
        // Predicated region
        $region25: #{tpu_custom_call.1} parent=11 // pred_check
          %p400 = pneg %p187
        $region26: #{tpu_custom_call.1} parent=11 // pred_check_branch
          %402 = sbr.rel (%p400) target = $region28
        $region27: #{tpu_custom_call.1} parent=11 // pred_region
          _
        $region28: #{tpu_custom_call.1} parent=11 // pred_fallthru
          _
        // Predicated region
        $region29: #{tpu_custom_call.1} parent=11 // pred_check
          %p403 = pneg %p208
        $region30: #{tpu_custom_call.1} parent=11 // pred_check_branch
          %405 = sbr.rel (%p403) target = $region32
        $region31: #{tpu_custom_call.1} parent=11 // pred_region
          _
        $region32: #{tpu_custom_call.1} parent=11 // pred_fallthru
          _
        // Predicated region
        $region33: #{tpu_custom_call.1} parent=11 // pred_check
          %p406 = pneg %p229
        $region34: #{tpu_custom_call.1} parent=11 // pred_check_branch
          %408 = sbr.rel (%p406) target = $region36
        $region35: #{tpu_custom_call.1} parent=11 // pred_region
          %410 = vsyncadd [#allocation4], 0
          %s411 = sshll.u32 %s8, 4
          %s412 = int_to_ptr.hbm [resolvable:$true] %s411
          %s413 = sshll.u32 [#allocation3], 4
          %s414 = int_to_ptr.vmem [resolvable:$true] %s413
          %419 = dma.hbm_to_vmem [thread:$0]  %s412, 1024, %s414, [#allocation4], 64, 64, 4
        $region36: #{tpu_custom_call.1} parent=11 // pred_fallthru
          _
        // Predicated region
        $region37: #{tpu_custom_call.1} parent=11 // pred_check
          %p420 = pneg %p250
        $region38: #{tpu_custom_call.1} parent=11 // pred_check_branch
          %422 = sbr.rel (%p420) target = $region40
        $region39: #{tpu_custom_call.1} parent=11 // pred_region
          _
        $region40: #{tpu_custom_call.1} parent=11 // pred_fallthru
          _
        // Predicated region
        $region41: #{tpu_custom_call.1} parent=11 // pred_check
          %p423 = pneg %p271
        $region42: #{tpu_custom_call.1} parent=11 // pred_check_branch
          %425 = sbr.rel (%p423) target = $region44
        $region43: #{tpu_custom_call.1} parent=11 // pred_region
          %427 = vsyncadd [#allocation7], 0
          %s428 = sshll.u32 %s10, 4
          %s429 = int_to_ptr.hbm [resolvable:$true] %s428
          %s430 = sshll.u32 [#allocation6], 4
          %s431 = int_to_ptr.vmem [resolvable:$true] %s430
          %436 = dma.hbm_to_vmem [thread:$0]  %s429, 1024, %s431, [#allocation7], 64, 64, 4
        $region44: #{tpu_custom_call.1} parent=11 // pred_fallthru
          _
        // Predicated region
        $region45: #{tpu_custom_call.1} parent=11 // pred_check
          %p437 = pneg %p292
        $region46: #{tpu_custom_call.1} parent=11 // pred_check_branch
          %439 = sbr.rel (%p437) target = $region48
        $region47: #{tpu_custom_call.1} parent=11 // pred_region
          %441 = vsyncadd [#allocation7], 0
          %s442 = sshll.u32 %s11, 4
          %s443 = int_to_ptr.hbm [resolvable:$true] %s442
          %s444 = sshll.u32 [#allocation8], 4
          %s445 = int_to_ptr.vmem [resolvable:$true] %s444
          %450 = dma.hbm_to_vmem [thread:$0]  %s443, 1024, %s445, [#allocation7], 64, 64, 4
        $region48: #{tpu_custom_call.1} parent=11 // pred_fallthru
          _
        // Predicated region
        $region49: #{tpu_custom_call.1} parent=11 // pred_check
          %p451 = pneg %p313
        $region50: #{tpu_custom_call.1} parent=11 // pred_check_branch
          %453 = sbr.rel (%p451) target = $region52
        $region51: #{tpu_custom_call.1} parent=11 // pred_region
          _
        $region52: #{tpu_custom_call.1} parent=11 // pred_fallthru
          _
        // Predicated region
        $region53: #{tpu_custom_call.1} parent=11 // pred_check
          %p454 = pneg %p334
        $region54: #{tpu_custom_call.1} parent=11 // pred_check_branch
          %456 = sbr.rel (%p454) target = $region56
        $region55: #{tpu_custom_call.1} parent=11 // pred_region
          %458 = vsyncadd [#allocation10], 0
          %s459 = sshll.u32 %s13, 4
          %s460 = int_to_ptr.hbm [resolvable:$true] %s459
          %s461 = sshll.u32 [#allocation9], 4
          %s462 = int_to_ptr.vmem [resolvable:$true] %s461
          %467 = dma.hbm_to_vmem [thread:$0]  %s460, 1024, %s462, [#allocation10], 64, 64, 4
        $region56: #{tpu_custom_call.1} parent=11 // pred_fallthru
          _
        // Predicated region
        $region57: #{tpu_custom_call.1} parent=11 // pred_check
          %p468 = pneg %p355
        $region58: #{tpu_custom_call.1} parent=11 // pred_check_branch
          %470 = sbr.rel (%p468) target = $region60
        $region59: #{tpu_custom_call.1} parent=11 // pred_region
          _
        $region60: #{tpu_custom_call.1} parent=11 // pred_fallthru
          _
      $region12: #{tpu_custom_call.1} parent=5 // pred_fallthru
        _
      %p471 = scmp.lt.s32.totalorder %s25, 3
      // Predicated region
      $region61: #{tpu_custom_call.1} parent=5 // pred_check
        %p472 = pneg %p471
      $region62: #{tpu_custom_call.1} parent=5 // pred_check_branch
        %474 = sbr.rel (%p472) target = $region64
      $region63: #{tpu_custom_call.1} parent=5 // pred_region
        // Predicated region
        $region65: #{tpu_custom_call.1} parent=63 // pred_check
          %p475 = pneg %p66
        $region66: #{tpu_custom_call.1} parent=63 // pred_check_branch
          %477 = sbr.rel (%p475) target = $region68
        $region67: #{tpu_custom_call.1} parent=63 // pred_region
          %s478 = smul.u32 2, %s25
          %p479 = scmp.lt.s32.totalorder %s478, 5
          %s480 = scalar_select %p479, %s478, 5
          %s481 = smul.addr %s480, 4
          %s482 = scalar_lea.vmem %s1, %s481
          %s483 = smul.u32 2, %s25
        $region68: #{tpu_custom_call.1} parent=63 // pred_fallthru
          _
        // Predicated region
        $region69: #{tpu_custom_call.1} parent=63 // pred_check
          %p484 = pneg %p92
        $region70: #{tpu_custom_call.1} parent=63 // pred_check_branch
          %486 = sbr.rel (%p484) target = $region72
        $region71: #{tpu_custom_call.1} parent=63 // pred_region
          %s487 = smul.u32 2, %s25
          %p488 = scmp.lt.s32.totalorder %s487, 5
          %s489 = scalar_select %p488, %s487, 5
          %s490 = smul.addr %s489, 8
          %s491 = scalar_lea.vmem %s2, %s490
          %s492 = smul.u32 2, %s25
        $region72: #{tpu_custom_call.1} parent=63 // pred_fallthru
          _
        // Predicated region
        $region73: #{tpu_custom_call.1} parent=63 // pred_check
          %p493 = pneg %p118
        $region74: #{tpu_custom_call.1} parent=63 // pred_check_branch
          %495 = sbr.rel (%p493) target = $region76
        $region75: #{tpu_custom_call.1} parent=63 // pred_region
          %s496 = smul.u32 2, %s25
          %p497 = scmp.lt.s32.totalorder %s496, 5
          %s498 = scalar_select %p497, %s496, 5
          %s499 = smul.addr %s498, 8
          %s500 = scalar_lea.vmem %s3, %s499
          %s501 = smul.u32 2, %s25
        $region76: #{tpu_custom_call.1} parent=63 // pred_fallthru
          _
      $region64: #{tpu_custom_call.1} parent=5 // pred_fallthru
        _
      %p502 = scmp.le.s32.totalorder 1, %s25
      %p503 = scmp.lt.s32.totalorder %s25, 4
      %p504 = pnand %p502, %p503
      %p505 = pneg %p504
      // Predicated region
      $region77: #{tpu_custom_call.1} parent=5 // pred_check
        _
      $region78: #{tpu_custom_call.1} parent=5 // pred_check_branch
        %507 = sbr.rel (%p504) target = $region80
      $region79: #{tpu_custom_call.1} parent=5 // pred_region
        %s508 = ssub.s32 %s25, 1
        // Predicated region
        $region81: #{tpu_custom_call.1} parent=79 // pred_check
          %p509 = pneg %p229
        $region82: #{tpu_custom_call.1} parent=79 // pred_check_branch
          %511 = sbr.rel (%p509) target = $region84
        $region83: #{tpu_custom_call.1} parent=79 // pred_region
          %513 = dma.done [#allocation4], 1024
        $region84: #{tpu_custom_call.1} parent=79 // pred_fallthru
          _
        // Predicated region
        $region85: #{tpu_custom_call.1} parent=79 // pred_check
          %p514 = pneg %p271
        $region86: #{tpu_custom_call.1} parent=79 // pred_check_branch
          %516 = sbr.rel (%p514) target = $region88
        $region87: #{tpu_custom_call.1} parent=79 // pred_region
          %518 = dma.done [#allocation7], 1024
        $region88: #{tpu_custom_call.1} parent=79 // pred_fallthru
          _
        // Predicated region
        $region89: #{tpu_custom_call.1} parent=79 // pred_check
          %p519 = pneg %p292
        $region90: #{tpu_custom_call.1} parent=79 // pred_check_branch
          %521 = sbr.rel (%p519) target = $region92
        $region91: #{tpu_custom_call.1} parent=79 // pred_region
          %523 = dma.done [#allocation7], 1024
        $region92: #{tpu_custom_call.1} parent=79 // pred_fallthru
          _
        // Predicated region
        $region93: #{tpu_custom_call.1} parent=79 // pred_check
          %p524 = pneg %p334
        $region94: #{tpu_custom_call.1} parent=79 // pred_check_branch
          %526 = sbr.rel (%p524) target = $region96
        $region95: #{tpu_custom_call.1} parent=79 // pred_region
          %528 = dma.done [#allocation10], 1024
        $region96: #{tpu_custom_call.1} parent=79 // pred_fallthru
          _
        %p529 = pneg %p46
        %p530 = pneg %p43
        %s531 = smul.u32 2, %s30
        %p532 = scmp.lt.s32.totalorder %s531, 5
        %s533 = scalar_select %p532, %s531, 5
        %s534 = smul.addr %s533, 4
        %s535 = scalar_lea.vmem %s1, %s534
        %p536 = pneg %p72
        %p537 = pneg %p69
        %s538 = smul.u32 2, %s30
        %p539 = scmp.lt.s32.totalorder %s538, 5
        %s540 = scalar_select %p539, %s538, 5
        %s541 = smul.addr %s540, 8
        %s542 = scalar_lea.vmem %s2, %s541
        %p543 = pneg %p98
        %p544 = pneg %p95
        %s545 = smul.u32 2, %s30
        %p546 = scmp.lt.s32.totalorder %s545, 5
        %s547 = scalar_select %p546, %s545, 5
        %s548 = smul.addr %s547, 8
        %s549 = scalar_lea.vmem %s3, %s548
        %p550 = pneg %p124
        %p551 = pneg %p121
        %p552 = pneg %p145
        %p553 = pneg %p142
        %p554 = pneg %p166
        %p555 = pneg %p163
        %p556 = pneg %p187
        %p557 = pneg %p184
        %p558 = pneg %p208
        %p559 = pneg %p205
        %p560 = pneg %p229
        %p561 = pneg %p226
        %p562 = pneg %p250
        %p563 = pneg %p247
        %p564 = pneg %p271
        %p565 = pneg %p268
        %p566 = pneg %p292
        %p567 = pneg %p289
        %p568 = pneg %p313
        %p569 = pneg %p310
        %p570 = pneg %p334
        %p571 = pneg %p331
        %p572 = pneg %p355
        %p573 = pneg %p352
        %p574 = pneg %p376
        %p575 = pneg %p373
        %s576 = smul.u32 2, %s30
        %p577 = scmp.lt.s32.totalorder %s576, 5
        %s578 = scalar_select %p577, %s576, 5
        %s579 = smul.addr %s578, 4
        %s580 = scalar_lea.vmem %s1, %s579
        %s581 = smul.u32 2, %s30
        %s582 = smul.u32 2, %s30
        %p583 = scmp.lt.s32.totalorder %s582, 5
        %s584 = scalar_select %p583, %s582, 5
        %s585 = smul.addr %s584, 8
        %s586 = scalar_lea.vmem %s2, %s585
        %s587 = smul.u32 2, %s30
        %s588 = smul.u32 2, %s30
        %p589 = scmp.lt.s32.totalorder %s588, 5
        %s590 = scalar_select %p589, %s588, 5
        %s591 = smul.addr %s590, 8
        %s592 = scalar_lea.vmem %s3, %s591
        %s593 = smul.u32 2, %s30
        %p595 = scmp.eq.s32.totalorder %s30, 0
        // Predicated region
        $region97: #{tpu_custom_call.1} parent=79 // pred_check
          %p596 = pneg %p595
        $region98: #{tpu_custom_call.1} parent=79 // pred_check_branch
          %598 = sbr.rel (%p596) target = $region100
        $region99: #{tpu_custom_call.1} parent=79 // pred_region
          %599 = vst [vmem:[#allocation2] sm:$0xff] 0.0
          %600 = vst [vmem:[#allocation2 + $0x8] sm:$0xff] 0.0
          %601 = vst [vmem:[#allocation2 + $0x10] sm:$0xff] 0.0
          %602 = vst [vmem:[#allocation2 + $0x18] sm:$0xff] 0.0
          %603 = vst [vmem:[#allocation2 + $0x20] sm:$0xff] 0.0
          %604 = vst [vmem:[#allocation2 + $0x28] sm:$0xff] 0.0
          %605 = vst [vmem:[#allocation2 + $0x30] sm:$0xff] 0.0
          %606 = vst [vmem:[#allocation2 + $0x38] sm:$0xff] 0.0
          %607 = vst [vmem:[#allocation2 + $0x40] sm:$0xff] 0.0
          %608 = vst [vmem:[#allocation2 + $0x48] sm:$0xff] 0.0
          %609 = vst [vmem:[#allocation2 + $0x50] sm:$0xff] 0.0
          %610 = vst [vmem:[#allocation2 + $0x58] sm:$0xff] 0.0
          %611 = vst [vmem:[#allocation2 + $0x60] sm:$0xff] 0.0
          %612 = vst [vmem:[#allocation2 + $0x68] sm:$0xff] 0.0
          %613 = vst [vmem:[#allocation2 + $0x70] sm:$0xff] 0.0
          %614 = vst [vmem:[#allocation2 + $0x78] sm:$0xff] 0.0
        $region100: #{tpu_custom_call.1} parent=79 // pred_fallthru
          _
        %v615 = vld [vmem:[%s586] sm:$0xff]
        %v616 = vld [vmem:[%s586 + $0x8] sm:$0xff]
        %v617 = vld [vmem:[%s592] sm:$0xff]
        %v618 = vld [vmem:[%s592 + $0x8] sm:$0xff]
        %v619 = vlaneseq
        %v620 = vand.u32 %v619, 127
        %621 = vset.pattern.permute.xlu0 0
        %622 = vperm.xlu0 %621, %v615
        %v623 = vpop.permute.xlu0 %622
        %624 = vset.pattern.permute.xlu0 0
        %625 = vperm.xlu0 %624, %v616
        %v626 = vpop.permute.xlu0 %625
        %vm627 = vcmp.eq.s32.totalorder %v620, %v623
        %vm628 = vcmp.eq.s32.totalorder %v620, %v626
        %v629 = vsel %vm627, 1, 0
        %v630 = vsel %vm628, 1, 0
        %v631 = vcvt.s32.f32 %v629
        %v632 = vcvt.s32.f32 %v630
        %v633 = vpack.c.bf16 %v632, %v631
        %v634 = vld [vmem:[%s0] sm:$0xf]
        %v635 = vld [vmem:[%s0 + $0x4] sm:$0xf]
        %v636 = vld [vmem:[%s0 + $0x8] sm:$0xf]
        %v637 = vld [vmem:[%s0 + $0xc] sm:$0xf]
        %v638 = vld [vmem:[%s0 + $0x10] sm:$0xf]
        %v639 = vld [vmem:[%s0 + $0x14] sm:$0xf]
        %v640 = vld [vmem:[%s0 + $0x18] sm:$0xf]
        %v641 = vld [vmem:[%s0 + $0x1c] sm:$0xf]
        %v642 = vld [vmem:[%s0 + $0x20] sm:$0xf]
        %v643 = vld [vmem:[%s0 + $0x24] sm:$0xf]
        %v644 = vld [vmem:[%s0 + $0x28] sm:$0xf]
        %v645 = vld [vmem:[%s0 + $0x2c] sm:$0xf]
        %v646 = vld [vmem:[%s0 + $0x30] sm:$0xf]
        %v647 = vld [vmem:[%s0 + $0x34] sm:$0xf]
        %v648 = vld [vmem:[%s0 + $0x38] sm:$0xf]
        %v649 = vld [vmem:[%s0 + $0x3c] sm:$0xf]
        %v666 = vunpack.c.l.b16 %v634
        %v667 = vunpack.c.l.b16 %v635
        %v668 = vunpack.c.l.b16 %v636
        %v669 = vunpack.c.l.b16 %v637
        %v670 = vunpack.c.l.b16 %v638
        %v671 = vunpack.c.l.b16 %v639
        %v672 = vunpack.c.l.b16 %v640
        %v673 = vunpack.c.l.b16 %v641
        %v674 = vunpack.c.l.b16 %v642
        %v675 = vunpack.c.l.b16 %v643
        %v676 = vunpack.c.l.b16 %v644
        %v677 = vunpack.c.l.b16 %v645
        %v678 = vunpack.c.l.b16 %v646
        %v679 = vunpack.c.l.b16 %v647
        %v680 = vunpack.c.l.b16 %v648
        %v681 = vunpack.c.l.b16 %v649
        %v682 = vpack.c.b16 %v667, %v666
        %v683 = vpack.c.b16 %v669, %v668
        %v684 = vpack.c.b16 %v671, %v670
        %v685 = vpack.c.b16 %v673, %v672
        %v686 = vpack.c.b16 %v675, %v674
        %v687 = vpack.c.b16 %v677, %v676
        %v688 = vpack.c.b16 %v679, %v678
        %v689 = vpack.c.b16 %v681, %v680
        %698 = vmatpush.bf16.msra.mxu0 %v689
        %699 = vmatpush.bf16.msra.mxu0 %v688
        %700 = vmatpush.bf16.msra.mxu0 %v687
        %701 = vmatpush.bf16.msra.mxu0 %v686
        %702 = vmatpush.bf16.msra.mxu0 %v685
        %703 = vmatpush.bf16.msra.mxu0 %v684
        %704 = vmatpush.bf16.msra.mxu0 %v683
        %705 = vmatpush.bf16.msra.mxu0 %v682
        %706 = vmatmul.bf16.gmra.mxu0 %v633
        %v707 = vpop.f32.mrf.mxu0
        %v708 = vadd.f32 0.0, %v707
        %v709 = vpop.f32.mrf.mxu0
        %v710 = vadd.f32 0.0, %v709
        %711 = vdwg.mxu0
        %v712 = vpack.c.bf16 %v710, %v708
        %v713 = vld [vmem:[%s5] sm:$0xf]
        %v714 = vld [vmem:[%s5 + $0x4] sm:$0xf]
        %v715 = vld [vmem:[%s5 + $0x8] sm:$0xf]
        %v716 = vld [vmem:[%s5 + $0xc] sm:$0xf]
        %v717 = vld [vmem:[%s5 + $0x10] sm:$0xf]
        %v718 = vld [vmem:[%s5 + $0x14] sm:$0xf]
        %v719 = vld [vmem:[%s5 + $0x18] sm:$0xf]
        %v720 = vld [vmem:[%s5 + $0x1c] sm:$0xf]
        %v721 = vld [vmem:[%s5 + $0x20] sm:$0xf]
        %v722 = vld [vmem:[%s5 + $0x24] sm:$0xf]
        %v723 = vld [vmem:[%s5 + $0x28] sm:$0xf]
        %v724 = vld [vmem:[%s5 + $0x2c] sm:$0xf]
        %v725 = vld [vmem:[%s5 + $0x30] sm:$0xf]
        %v726 = vld [vmem:[%s5 + $0x34] sm:$0xf]
        %v727 = vld [vmem:[%s5 + $0x38] sm:$0xf]
        %v728 = vld [vmem:[%s5 + $0x3c] sm:$0xf]
        %v729 = vld [vmem:[%s580] sm:$0xf]
        %v730 = vld [vmem:[%s580 + $0x4] sm:$0xf]
        %v731 = vld [vmem:[%s6] sm:$0xf]
        %v732 = vld [vmem:[%s6 + $0x4] sm:$0xf]
        %v733 = vld [vmem:[%s6 + $0x8] sm:$0xf]
        %v734 = vld [vmem:[%s6 + $0xc] sm:$0xf]
        %v735 = vld [vmem:[%s6 + $0x10] sm:$0xf]
        %v736 = vld [vmem:[%s6 + $0x14] sm:$0xf]
        %v737 = vld [vmem:[%s6 + $0x18] sm:$0xf]
        %v738 = vld [vmem:[%s6 + $0x1c] sm:$0xf]
        %v739 = vld [vmem:[%s6 + $0x20] sm:$0xf]
        %v740 = vld [vmem:[%s6 + $0x24] sm:$0xf]
        %v741 = vld [vmem:[%s6 + $0x28] sm:$0xf]
        %v742 = vld [vmem:[%s6 + $0x2c] sm:$0xf]
        %v743 = vld [vmem:[%s6 + $0x30] sm:$0xf]
        %v744 = vld [vmem:[%s6 + $0x34] sm:$0xf]
        %v745 = vld [vmem:[%s6 + $0x38] sm:$0xf]
        %v746 = vld [vmem:[%s6 + $0x3c] sm:$0xf]
        %v749 = vunpack.c.l.b16 %v729
        %v750 = vunpack.c.l.b16 %v730
        %v751 = vpack.c.b16 %v750, %v749
        %v769 = vunpack.c.l.b16 %v731
        %v770 = vunpack.c.l.b16 %v732
        %v771 = vunpack.c.l.b16 %v733
        %v772 = vunpack.c.l.b16 %v734
        %v773 = vunpack.c.l.b16 %v735
        %v774 = vunpack.c.l.b16 %v736
        %v775 = vunpack.c.l.b16 %v737
        %v776 = vunpack.c.l.b16 %v738
        %v777 = vunpack.c.l.b16 %v739
        %v778 = vunpack.c.l.b16 %v740
        %v779 = vunpack.c.l.b16 %v741
        %v780 = vunpack.c.l.b16 %v742
        %v781 = vunpack.c.l.b16 %v743
        %v782 = vunpack.c.l.b16 %v744
        %v783 = vunpack.c.l.b16 %v745
        %v784 = vunpack.c.l.b16 %v746
        %v785 = vpack.c.b16 %v770, %v769
        %v786 = vpack.c.b16 %v772, %v771
        %v787 = vpack.c.b16 %v774, %v773
        %v788 = vpack.c.b16 %v776, %v775
        %v789 = vpack.c.b16 %v778, %v777
        %v790 = vpack.c.b16 %v780, %v779
        %v791 = vpack.c.b16 %v782, %v781
        %v792 = vpack.c.b16 %v784, %v783
        %801 = vmatpush.bf16.msra.mxu0 %v792
        %802 = vmatpush.bf16.msra.mxu0 %v791
        %803 = vmatpush.bf16.msra.mxu0 %v790
        %804 = vmatpush.bf16.msra.mxu0 %v789
        %805 = vmatpush.bf16.msra.mxu0 %v788
        %806 = vmatpush.bf16.msra.mxu0 %v787
        %807 = vmatpush.bf16.msra.mxu0 %v786
        %808 = vmatpush.bf16.msra.mxu0 %v785
        %809 = vmatmul.bf16.gmra.mxu0 %v751
        %v810 = vpop.f32.mrf.mxu0
        %v811 = vadd.f32 0.0, %v810
        %v812 = vpop.f32.mrf.mxu0
        %v813 = vadd.f32 0.0, %v812
        %814 = vdwg.mxu0
        %v831 = vunpack.c.l.b16 %v713
        %v832 = vunpack.c.l.b16 %v714
        %v833 = vunpack.c.l.b16 %v715
        %v834 = vunpack.c.l.b16 %v716
        %v835 = vunpack.c.l.b16 %v717
        %v836 = vunpack.c.l.b16 %v718
        %v837 = vunpack.c.l.b16 %v719
        %v838 = vunpack.c.l.b16 %v720
        %v839 = vunpack.c.l.b16 %v721
        %v840 = vunpack.c.l.b16 %v722
        %v841 = vunpack.c.l.b16 %v723
        %v842 = vunpack.c.l.b16 %v724
        %v843 = vunpack.c.l.b16 %v725
        %v844 = vunpack.c.l.b16 %v726
        %v845 = vunpack.c.l.b16 %v727
        %v846 = vunpack.c.l.b16 %v728
        %v847 = vpack.c.b16 %v832, %v831
        %v848 = vpack.c.b16 %v834, %v833
        %v849 = vpack.c.b16 %v836, %v835
        %v850 = vpack.c.b16 %v838, %v837
        %v851 = vpack.c.b16 %v840, %v839
        %v852 = vpack.c.b16 %v842, %v841
        %v853 = vpack.c.b16 %v844, %v843
        %v854 = vpack.c.b16 %v846, %v845
        %863 = vmatpush.bf16.msra.mxu0 %v854
        %864 = vmatpush.bf16.msra.mxu0 %v853
        %865 = vmatpush.bf16.msra.mxu0 %v852
        %866 = vmatpush.bf16.msra.mxu0 %v851
        %867 = vmatpush.bf16.msra.mxu0 %v850
        %868 = vmatpush.bf16.msra.mxu0 %v849
        %869 = vmatpush.bf16.msra.mxu0 %v848
        %870 = vmatpush.bf16.msra.mxu0 %v847
        %871 = vmatmul.bf16.gmra.mxu0 %v712
        %v872 = vpop.f32.mrf.mxu0
        %v873 = vadd.f32 %v811, %v872
        %v874 = vpop.f32.mrf.mxu0
        %v875 = vadd.f32 %v813, %v874
        %876 = vdwg.mxu0
        %v877 = vld [vmem:[%s7] sm:$0x1]
        %v879 = vperm.slane %v877, 0
        %v881 = vadd.f32 %v873, %v879
        %v882 = vadd.f32 %v875, %v879
        %v883 = vmax.f32 %v881, 0.0
        %v884 = vmax.f32 %v882, 0.0
        %v885 = vpack.c.bf16 %v884, %v883
        %v886 = vld [vmem:[#allocation3] sm:$0xf]
        %v887 = vld [vmem:[#allocation3 + $0x4] sm:$0xf]
        %v888 = vld [vmem:[#allocation3 + $0x8] sm:$0xf]
        %v889 = vld [vmem:[#allocation3 + $0xc] sm:$0xf]
        %v890 = vld [vmem:[#allocation3 + $0x10] sm:$0xf]
        %v891 = vld [vmem:[#allocation3 + $0x14] sm:$0xf]
        %v892 = vld [vmem:[#allocation3 + $0x18] sm:$0xf]
        %v893 = vld [vmem:[#allocation3 + $0x1c] sm:$0xf]
        %v894 = vld [vmem:[#allocation3 + $0x20] sm:$0xf]
        %v895 = vld [vmem:[#allocation3 + $0x24] sm:$0xf]
        %v896 = vld [vmem:[#allocation3 + $0x28] sm:$0xf]
        %v897 = vld [vmem:[#allocation3 + $0x2c] sm:$0xf]
        %v898 = vld [vmem:[#allocation3 + $0x30] sm:$0xf]
        %v899 = vld [vmem:[#allocation3 + $0x34] sm:$0xf]
        %v900 = vld [vmem:[#allocation3 + $0x38] sm:$0xf]
        %v901 = vld [vmem:[#allocation3 + $0x3c] sm:$0xf]
        %v902 = vld [vmem:[%s9] sm:$0x1]
        %v904 = vperm.slane %v902, 0
        %v922 = vunpack.c.l.b16 %v886
        %v923 = vunpack.c.l.b16 %v887
        %v924 = vunpack.c.l.b16 %v888
        %v925 = vunpack.c.l.b16 %v889
        %v926 = vunpack.c.l.b16 %v890
        %v927 = vunpack.c.l.b16 %v891
        %v928 = vunpack.c.l.b16 %v892
        %v929 = vunpack.c.l.b16 %v893
        %v930 = vunpack.c.l.b16 %v894
        %v931 = vunpack.c.l.b16 %v895
        %v932 = vunpack.c.l.b16 %v896
        %v933 = vunpack.c.l.b16 %v897
        %v934 = vunpack.c.l.b16 %v898
        %v935 = vunpack.c.l.b16 %v899
        %v936 = vunpack.c.l.b16 %v900
        %v937 = vunpack.c.l.b16 %v901
        %v938 = vpack.c.b16 %v923, %v922
        %v939 = vpack.c.b16 %v925, %v924
        %v940 = vpack.c.b16 %v927, %v926
        %v941 = vpack.c.b16 %v929, %v928
        %v942 = vpack.c.b16 %v931, %v930
        %v943 = vpack.c.b16 %v933, %v932
        %v944 = vpack.c.b16 %v935, %v934
        %v945 = vpack.c.b16 %v937, %v936
        %954 = vmatpush.bf16.msra.mxu0 %v945
        %955 = vmatpush.bf16.msra.mxu0 %v944
        %956 = vmatpush.bf16.msra.mxu0 %v943
        %957 = vmatpush.bf16.msra.mxu0 %v942
        %958 = vmatpush.bf16.msra.mxu0 %v941
        %959 = vmatpush.bf16.msra.mxu0 %v940
        %960 = vmatpush.bf16.msra.mxu0 %v939
        %961 = vmatpush.bf16.msra.mxu0 %v938
        %962 = vmatmul.bf16.gmra.mxu0 %v885
        %v963 = vpop.f32.mrf.mxu0
        %v964 = vadd.f32 %v904, %v963
        %v965 = vpop.f32.mrf.mxu0
        %v966 = vadd.f32 %v904, %v965
        %967 = vdwg.mxu0
        %968 = vset.pattern.permute.xlu0 0
        %969 = vperm.xlu0 %968, %v617
        %v970 = vpop.permute.xlu0 %969
        %971 = vset.pattern.permute.xlu0 0
        %972 = vperm.xlu0 %971, %v618
        %v973 = vpop.permute.xlu0 %972
        %vm974 = vcmp.eq.s32.totalorder %v620, %v970
        %vm975 = vcmp.eq.s32.totalorder %v620, %v973
        %v976 = vsel %vm974, 1, 0
        %v977 = vsel %vm975, 1, 0
        %v978 = vcvt.s32.f32 %v976
        %v979 = vcvt.s32.f32 %v977
        %v980 = vpack.c.bf16 %v979, %v978
        %v981 = vld [vmem:[#allocation2] sm:$0xff]
        %v982 = vld [vmem:[#allocation2 + $0x8] sm:$0xff]
        %v983 = vld [vmem:[#allocation2 + $0x10] sm:$0xff]
        %v984 = vld [vmem:[#allocation2 + $0x18] sm:$0xff]
        %v985 = vld [vmem:[#allocation2 + $0x20] sm:$0xff]
        %v986 = vld [vmem:[#allocation2 + $0x28] sm:$0xff]
        %v987 = vld [vmem:[#allocation2 + $0x30] sm:$0xff]
        %v988 = vld [vmem:[#allocation2 + $0x38] sm:$0xff]
        %v989 = vld [vmem:[#allocation2 + $0x40] sm:$0xff]
        %v990 = vld [vmem:[#allocation2 + $0x48] sm:$0xff]
        %v991 = vld [vmem:[#allocation2 + $0x50] sm:$0xff]
        %v992 = vld [vmem:[#allocation2 + $0x58] sm:$0xff]
        %v993 = vld [vmem:[#allocation2 + $0x60] sm:$0xff]
        %v994 = vld [vmem:[#allocation2 + $0x68] sm:$0xff]
        %v995 = vld [vmem:[#allocation2 + $0x70] sm:$0xff]
        %v996 = vld [vmem:[#allocation2 + $0x78] sm:$0xff]
        %v997 = vpack.c.bf16 %v966, %v964
        %998 = vxpose.xlu0.c.b16.start [1/8] %v980, 128
        %999 = vxpose.xlu0.c.b16.cont [2/8] 0, 128
        %1000 = vxpose.xlu0.c.b16.cont [3/8] 0, 128
        %1001 = vxpose.xlu0.c.b16.cont [4/8] 0, 128
        %1002 = vxpose.xlu0.c.b16.cont [5/8] 0, 128
        %1003 = vxpose.xlu0.c.b16.cont [6/8] 0, 128
        %1004 = vxpose.xlu0.c.b16.cont [7/8] 0, 128
        %1005 = vxpose.xlu0.c.b16.end [8/8] 0, 128
        %v1006 = vpop.trf.xlu0
        %v1007 = vpop.trf.xlu0
        %v1008 = vpop.trf.xlu0
        %v1009 = vpop.trf.xlu0
        %v1010 = vpop.trf.xlu0
        %v1011 = vpop.trf.xlu0
        %v1012 = vpop.trf.xlu0
        %v1013 = vpop.trf.xlu0
        %vm1014 = vcmask 130048
        %v1016 = vsel %vm1014, %v1006, 0
        %v1019 = vsel %vm1014, %v1007, 0
        %v1022 = vsel %vm1014, %v1008, 0
        %v1025 = vsel %vm1014, %v1009, 0
        %v1028 = vsel %vm1014, %v1010, 0
        %v1031 = vsel %vm1014, %v1011, 0
        %v1034 = vsel %vm1014, %v1012, 0
        %v1037 = vsel %vm1014, %v1013, 0
        %1039 = vmatpush.bf16.msra.mxu0 0
        %1040 = vmatpush.bf16.msra.mxu0 0
        %1041 = vmatpush.bf16.msra.mxu0 0
        %1042 = vmatpush.bf16.msra.mxu0 0
        %1043 = vmatpush.bf16.msra.mxu0 0
        %1044 = vmatpush.bf16.msra.mxu0 0
        %1045 = vmatpush.bf16.msra.mxu0 0
        %1046 = vmatpush.bf16.msra.mxu0 %v997
        %1047 = vmatmul.bf16.gmra.mxu0 %v1016
        %v1048 = vpop.f32.mrf.mxu0
        %v1049 = vadd.f32 0.0, %v1048
        %v1050 = vpop.f32.mrf.mxu0
        %v1051 = vadd.f32 0.0, %v1050
        %1052 = vmatmul.bf16.gmra.mxu0 %v1019
        %v1053 = vpop.f32.mrf.mxu0
        %v1054 = vadd.f32 0.0, %v1053
        %v1055 = vpop.f32.mrf.mxu0
        %v1056 = vadd.f32 0.0, %v1055
        %1057 = vmatmul.bf16.gmra.mxu0 %v1022
        %v1058 = vpop.f32.mrf.mxu0
        %v1059 = vadd.f32 0.0, %v1058
        %v1060 = vpop.f32.mrf.mxu0
        %v1061 = vadd.f32 0.0, %v1060
        %1062 = vmatmul.bf16.gmra.mxu0 %v1025
        %v1063 = vpop.f32.mrf.mxu0
        %v1064 = vadd.f32 0.0, %v1063
        %v1065 = vpop.f32.mrf.mxu0
        %v1066 = vadd.f32 0.0, %v1065
        %1067 = vmatmul.bf16.gmra.mxu0 %v1028
        %v1068 = vpop.f32.mrf.mxu0
        %v1069 = vadd.f32 0.0, %v1068
        %v1070 = vpop.f32.mrf.mxu0
        %v1071 = vadd.f32 0.0, %v1070
        %1072 = vmatmul.bf16.gmra.mxu0 %v1031
        %v1073 = vpop.f32.mrf.mxu0
        %v1074 = vadd.f32 0.0, %v1073
        %v1075 = vpop.f32.mrf.mxu0
        %v1076 = vadd.f32 0.0, %v1075
        %1077 = vmatmul.bf16.gmra.mxu0 %v1034
        %v1078 = vpop.f32.mrf.mxu0
        %v1079 = vadd.f32 0.0, %v1078
        %v1080 = vpop.f32.mrf.mxu0
        %v1081 = vadd.f32 0.0, %v1080
        %1082 = vmatmul.bf16.gmra.mxu0 %v1037
        %v1083 = vpop.f32.mrf.mxu0
        %v1084 = vadd.f32 0.0, %v1083
        %v1085 = vpop.f32.mrf.mxu0
        %v1086 = vadd.f32 0.0, %v1085
        %1087 = vdwg.mxu0
        %v1088 = vadd.f32 %v981, %v1049
        %v1089 = vadd.f32 %v982, %v1051
        %v1090 = vadd.f32 %v983, %v1054
        %v1091 = vadd.f32 %v984, %v1056
        %v1092 = vadd.f32 %v985, %v1059
        %v1093 = vadd.f32 %v986, %v1061
        %v1094 = vadd.f32 %v987, %v1064
        %v1095 = vadd.f32 %v988, %v1066
        %v1096 = vadd.f32 %v989, %v1069
        %v1097 = vadd.f32 %v990, %v1071
        %v1098 = vadd.f32 %v991, %v1074
        %v1099 = vadd.f32 %v992, %v1076
        %v1100 = vadd.f32 %v993, %v1079
        %v1101 = vadd.f32 %v994, %v1081
        %v1102 = vadd.f32 %v995, %v1084
        %v1103 = vadd.f32 %v996, %v1086
        %1104 = vst [vmem:[#allocation2] sm:$0xff] %v1088
        %1105 = vst [vmem:[#allocation2 + $0x8] sm:$0xff] %v1089
        %1106 = vst [vmem:[#allocation2 + $0x10] sm:$0xff] %v1090
        %1107 = vst [vmem:[#allocation2 + $0x18] sm:$0xff] %v1091
        %1108 = vst [vmem:[#allocation2 + $0x20] sm:$0xff] %v1092
        %1109 = vst [vmem:[#allocation2 + $0x28] sm:$0xff] %v1093
        %1110 = vst [vmem:[#allocation2 + $0x30] sm:$0xff] %v1094
        %1111 = vst [vmem:[#allocation2 + $0x38] sm:$0xff] %v1095
        %1112 = vst [vmem:[#allocation2 + $0x40] sm:$0xff] %v1096
        %1113 = vst [vmem:[#allocation2 + $0x48] sm:$0xff] %v1097
        %1114 = vst [vmem:[#allocation2 + $0x50] sm:$0xff] %v1098
        %1115 = vst [vmem:[#allocation2 + $0x58] sm:$0xff] %v1099
        %1116 = vst [vmem:[#allocation2 + $0x60] sm:$0xff] %v1100
        %1117 = vst [vmem:[#allocation2 + $0x68] sm:$0xff] %v1101
        %1118 = vst [vmem:[#allocation2 + $0x70] sm:$0xff] %v1102
        %1119 = vst [vmem:[#allocation2 + $0x78] sm:$0xff] %v1103
        %p1120 = scmp.eq.s32.totalorder %s30, 2
        // Predicated region
        $region101: #{tpu_custom_call.1} parent=79 // pred_check
          %p1121 = pneg %p1120
        $region102: #{tpu_custom_call.1} parent=79 // pred_check_branch
          %1123 = sbr.rel (%p1121) target = $region104
        $region103: #{tpu_custom_call.1} parent=79 // pred_region
          %v1124 = vld [vmem:[#allocation2] sm:$0xff]
          %v1125 = vld [vmem:[#allocation2 + $0x8] sm:$0xff]
          %v1126 = vld [vmem:[#allocation2 + $0x10] sm:$0xff]
          %v1127 = vld [vmem:[#allocation2 + $0x18] sm:$0xff]
          %v1128 = vld [vmem:[#allocation2 + $0x20] sm:$0xff]
          %v1129 = vld [vmem:[#allocation2 + $0x28] sm:$0xff]
          %v1130 = vld [vmem:[#allocation2 + $0x30] sm:$0xff]
          %v1131 = vld [vmem:[#allocation2 + $0x38] sm:$0xff]
          %v1132 = vld [vmem:[#allocation2 + $0x40] sm:$0xff]
          %v1133 = vld [vmem:[#allocation2 + $0x48] sm:$0xff]
          %v1134 = vld [vmem:[#allocation2 + $0x50] sm:$0xff]
          %v1135 = vld [vmem:[#allocation2 + $0x58] sm:$0xff]
          %v1136 = vld [vmem:[#allocation2 + $0x60] sm:$0xff]
          %v1137 = vld [vmem:[#allocation2 + $0x68] sm:$0xff]
          %v1138 = vld [vmem:[#allocation2 + $0x70] sm:$0xff]
          %v1139 = vld [vmem:[#allocation2 + $0x78] sm:$0xff]
          %v1140 = vld [vmem:[%s4] sm:$0xff]
          %v1141 = vld [vmem:[%s4 + $0x8] sm:$0xff]
          %v1142 = vld [vmem:[%s4 + $0x10] sm:$0xff]
          %v1143 = vld [vmem:[%s4 + $0x18] sm:$0xff]
          %v1144 = vld [vmem:[%s4 + $0x20] sm:$0xff]
          %v1145 = vld [vmem:[%s4 + $0x28] sm:$0xff]
          %v1146 = vld [vmem:[%s4 + $0x30] sm:$0xff]
          %v1147 = vld [vmem:[%s4 + $0x38] sm:$0xff]
          %v1148 = vld [vmem:[%s4 + $0x40] sm:$0xff]
          %v1149 = vld [vmem:[%s4 + $0x48] sm:$0xff]
          %v1150 = vld [vmem:[%s4 + $0x50] sm:$0xff]
          %v1151 = vld [vmem:[%s4 + $0x58] sm:$0xff]
          %v1152 = vld [vmem:[%s4 + $0x60] sm:$0xff]
          %v1153 = vld [vmem:[%s4 + $0x68] sm:$0xff]
          %v1154 = vld [vmem:[%s4 + $0x70] sm:$0xff]
          %v1155 = vld [vmem:[%s4 + $0x78] sm:$0xff]
          %1157 = vset.pattern.permute.xlu0 0
          %1158 = vperm.xlu0 %1157, %v1140
          %v1159 = vpop.permute.xlu0 %1158
          %1162 = vset.pattern.permute.xlu0 0
          %1163 = vperm.xlu0 %1162, %v1141
          %v1164 = vpop.permute.xlu0 %1163
          %1167 = vset.pattern.permute.xlu0 0
          %1168 = vperm.xlu0 %1167, %v1142
          %v1169 = vpop.permute.xlu0 %1168
          %1172 = vset.pattern.permute.xlu0 0
          %1173 = vperm.xlu0 %1172, %v1143
          %v1174 = vpop.permute.xlu0 %1173
          %1177 = vset.pattern.permute.xlu0 0
          %1178 = vperm.xlu0 %1177, %v1144
          %v1179 = vpop.permute.xlu0 %1178
          %1182 = vset.pattern.permute.xlu0 0
          %1183 = vperm.xlu0 %1182, %v1145
          %v1184 = vpop.permute.xlu0 %1183
          %1187 = vset.pattern.permute.xlu0 0
          %1188 = vperm.xlu0 %1187, %v1146
          %v1189 = vpop.permute.xlu0 %1188
          %1192 = vset.pattern.permute.xlu0 0
          %1193 = vperm.xlu0 %1192, %v1147
          %v1194 = vpop.permute.xlu0 %1193
          %1197 = vset.pattern.permute.xlu0 0
          %1198 = vperm.xlu0 %1197, %v1148
          %v1199 = vpop.permute.xlu0 %1198
          %1202 = vset.pattern.permute.xlu0 0
          %1203 = vperm.xlu0 %1202, %v1149
          %v1204 = vpop.permute.xlu0 %1203
          %1207 = vset.pattern.permute.xlu0 0
          %1208 = vperm.xlu0 %1207, %v1150
          %v1209 = vpop.permute.xlu0 %1208
          %1212 = vset.pattern.permute.xlu0 0
          %1213 = vperm.xlu0 %1212, %v1151
          %v1214 = vpop.permute.xlu0 %1213
          %1217 = vset.pattern.permute.xlu0 0
          %1218 = vperm.xlu0 %1217, %v1152
          %v1219 = vpop.permute.xlu0 %1218
          %1222 = vset.pattern.permute.xlu0 0
          %1223 = vperm.xlu0 %1222, %v1153
          %v1224 = vpop.permute.xlu0 %1223
          %1227 = vset.pattern.permute.xlu0 0
          %1228 = vperm.xlu0 %1227, %v1154
          %v1229 = vpop.permute.xlu0 %1228
          %1232 = vset.pattern.permute.xlu0 0
          %1233 = vperm.xlu0 %1232, %v1155
          %v1234 = vpop.permute.xlu0 %1233
          %v1236 = vmul.f32 %v1124, %v1159
          %v1237 = vmul.f32 %v1125, %v1164
          %v1238 = vmul.f32 %v1126, %v1169
          %v1239 = vmul.f32 %v1127, %v1174
          %v1240 = vmul.f32 %v1128, %v1179
          %v1241 = vmul.f32 %v1129, %v1184
          %v1242 = vmul.f32 %v1130, %v1189
          %v1243 = vmul.f32 %v1131, %v1194
          %v1244 = vmul.f32 %v1132, %v1199
          %v1245 = vmul.f32 %v1133, %v1204
          %v1246 = vmul.f32 %v1134, %v1209
          %v1247 = vmul.f32 %v1135, %v1214
          %v1248 = vmul.f32 %v1136, %v1219
          %v1249 = vmul.f32 %v1137, %v1224
          %v1250 = vmul.f32 %v1138, %v1229
          %v1251 = vmul.f32 %v1139, %v1234
          %v1252 = vld [vmem:[%s0] sm:$0xf]
          %v1253 = vld [vmem:[%s0 + $0x4] sm:$0xf]
          %v1254 = vld [vmem:[%s0 + $0x8] sm:$0xf]
          %v1255 = vld [vmem:[%s0 + $0xc] sm:$0xf]
          %v1256 = vld [vmem:[%s0 + $0x10] sm:$0xf]
          %v1257 = vld [vmem:[%s0 + $0x14] sm:$0xf]
          %v1258 = vld [vmem:[%s0 + $0x18] sm:$0xf]
          %v1259 = vld [vmem:[%s0 + $0x1c] sm:$0xf]
          %v1260 = vld [vmem:[%s0 + $0x20] sm:$0xf]
          %v1261 = vld [vmem:[%s0 + $0x24] sm:$0xf]
          %v1262 = vld [vmem:[%s0 + $0x28] sm:$0xf]
          %v1263 = vld [vmem:[%s0 + $0x2c] sm:$0xf]
          %v1264 = vld [vmem:[%s0 + $0x30] sm:$0xf]
          %v1265 = vld [vmem:[%s0 + $0x34] sm:$0xf]
          %v1266 = vld [vmem:[%s0 + $0x38] sm:$0xf]
          %v1267 = vld [vmem:[%s0 + $0x3c] sm:$0xf]
          %v1268 = vld [vmem:[#allocation6] sm:$0xf]
          %v1269 = vld [vmem:[#allocation6 + $0x4] sm:$0xf]
          %v1270 = vld [vmem:[#allocation6 + $0x8] sm:$0xf]
          %v1271 = vld [vmem:[#allocation6 + $0xc] sm:$0xf]
          %v1272 = vld [vmem:[#allocation6 + $0x10] sm:$0xf]
          %v1273 = vld [vmem:[#allocation6 + $0x14] sm:$0xf]
          %v1274 = vld [vmem:[#allocation6 + $0x18] sm:$0xf]
          %v1275 = vld [vmem:[#allocation6 + $0x1c] sm:$0xf]
          %v1276 = vld [vmem:[#allocation6 + $0x20] sm:$0xf]
          %v1277 = vld [vmem:[#allocation6 + $0x24] sm:$0xf]
          %v1278 = vld [vmem:[#allocation6 + $0x28] sm:$0xf]
          %v1279 = vld [vmem:[#allocation6 + $0x2c] sm:$0xf]
          %v1280 = vld [vmem:[#allocation6 + $0x30] sm:$0xf]
          %v1281 = vld [vmem:[#allocation6 + $0x34] sm:$0xf]
          %v1282 = vld [vmem:[#allocation6 + $0x38] sm:$0xf]
          %v1283 = vld [vmem:[#allocation6 + $0x3c] sm:$0xf]
          %v1284 = vpack.c.bf16 %v1237, %v1236
          %v1285 = vpack.c.bf16 %v1239, %v1238
          %v1286 = vpack.c.bf16 %v1241, %v1240
          %v1287 = vpack.c.bf16 %v1243, %v1242
          %v1288 = vpack.c.bf16 %v1245, %v1244
          %v1289 = vpack.c.bf16 %v1247, %v1246
          %v1290 = vpack.c.bf16 %v1249, %v1248
          %v1291 = vpack.c.bf16 %v1251, %v1250
          %v1292 = vld [vmem:[#allocation8] sm:$0xf]
          %v1293 = vld [vmem:[#allocation8 + $0x4] sm:$0xf]
          %v1294 = vld [vmem:[#allocation8 + $0x8] sm:$0xf]
          %v1295 = vld [vmem:[#allocation8 + $0xc] sm:$0xf]
          %v1296 = vld [vmem:[#allocation8 + $0x10] sm:$0xf]
          %v1297 = vld [vmem:[#allocation8 + $0x14] sm:$0xf]
          %v1298 = vld [vmem:[#allocation8 + $0x18] sm:$0xf]
          %v1299 = vld [vmem:[#allocation8 + $0x1c] sm:$0xf]
          %v1300 = vld [vmem:[#allocation8 + $0x20] sm:$0xf]
          %v1301 = vld [vmem:[#allocation8 + $0x24] sm:$0xf]
          %v1302 = vld [vmem:[#allocation8 + $0x28] sm:$0xf]
          %v1303 = vld [vmem:[#allocation8 + $0x2c] sm:$0xf]
          %v1304 = vld [vmem:[#allocation8 + $0x30] sm:$0xf]
          %v1305 = vld [vmem:[#allocation8 + $0x34] sm:$0xf]
          %v1306 = vld [vmem:[#allocation8 + $0x38] sm:$0xf]
          %v1307 = vld [vmem:[#allocation8 + $0x3c] sm:$0xf]
          %v1324 = vunpack.c.l.b16 %v1292
          %v1325 = vunpack.c.l.b16 %v1293
          %v1326 = vunpack.c.l.b16 %v1294
          %v1327 = vunpack.c.l.b16 %v1295
          %v1328 = vunpack.c.l.b16 %v1296
          %v1329 = vunpack.c.l.b16 %v1297
          %v1330 = vunpack.c.l.b16 %v1298
          %v1331 = vunpack.c.l.b16 %v1299
          %v1332 = vunpack.c.l.b16 %v1300
          %v1333 = vunpack.c.l.b16 %v1301
          %v1334 = vunpack.c.l.b16 %v1302
          %v1335 = vunpack.c.l.b16 %v1303
          %v1336 = vunpack.c.l.b16 %v1304
          %v1337 = vunpack.c.l.b16 %v1305
          %v1338 = vunpack.c.l.b16 %v1306
          %v1339 = vunpack.c.l.b16 %v1307
          %v1340 = vpack.c.b16 %v1325, %v1324
          %v1341 = vpack.c.b16 %v1327, %v1326
          %v1342 = vpack.c.b16 %v1329, %v1328
          %v1343 = vpack.c.b16 %v1331, %v1330
          %v1344 = vpack.c.b16 %v1333, %v1332
          %v1345 = vpack.c.b16 %v1335, %v1334
          %v1346 = vpack.c.b16 %v1337, %v1336
          %v1347 = vpack.c.b16 %v1339, %v1338
          %1356 = vmatpush.bf16.msra.mxu0 %v1347
          %1357 = vmatpush.bf16.msra.mxu0 %v1346
          %1358 = vmatpush.bf16.msra.mxu0 %v1345
          %1359 = vmatpush.bf16.msra.mxu0 %v1344
          %1360 = vmatpush.bf16.msra.mxu0 %v1343
          %1361 = vmatpush.bf16.msra.mxu0 %v1342
          %1362 = vmatpush.bf16.msra.mxu0 %v1341
          %1363 = vmatpush.bf16.msra.mxu0 %v1340
          %1364 = vmatmul.bf16.gmra.mxu0 %v1284
          %v1365 = vpop.f32.mrf.mxu0
          %v1366 = vadd.f32 0.0, %v1365
          %v1367 = vpop.f32.mrf.mxu0
          %v1368 = vadd.f32 0.0, %v1367
          %1369 = vmatmul.bf16.gmra.mxu0 %v1285
          %v1370 = vpop.f32.mrf.mxu0
          %v1371 = vadd.f32 0.0, %v1370
          %v1372 = vpop.f32.mrf.mxu0
          %v1373 = vadd.f32 0.0, %v1372
          %1374 = vmatmul.bf16.gmra.mxu0 %v1286
          %v1375 = vpop.f32.mrf.mxu0
          %v1376 = vadd.f32 0.0, %v1375
          %v1377 = vpop.f32.mrf.mxu0
          %v1378 = vadd.f32 0.0, %v1377
          %1379 = vmatmul.bf16.gmra.mxu0 %v1287
          %v1380 = vpop.f32.mrf.mxu0
          %v1381 = vadd.f32 0.0, %v1380
          %v1382 = vpop.f32.mrf.mxu0
          %v1383 = vadd.f32 0.0, %v1382
          %1384 = vmatmul.bf16.gmra.mxu0 %v1288
          %v1385 = vpop.f32.mrf.mxu0
          %v1386 = vadd.f32 0.0, %v1385
          %v1387 = vpop.f32.mrf.mxu0
          %v1388 = vadd.f32 0.0, %v1387
          %1389 = vmatmul.bf16.gmra.mxu0 %v1289
          %v1390 = vpop.f32.mrf.mxu0
          %v1391 = vadd.f32 0.0, %v1390
          %v1392 = vpop.f32.mrf.mxu0
          %v1393 = vadd.f32 0.0, %v1392
          %1394 = vmatmul.bf16.gmra.mxu0 %v1290
          %v1395 = vpop.f32.mrf.mxu0
          %v1396 = vadd.f32 0.0, %v1395
          %v1397 = vpop.f32.mrf.mxu0
          %v1398 = vadd.f32 0.0, %v1397
          %1399 = vmatmul.bf16.gmra.mxu0 %v1291
          %v1400 = vpop.f32.mrf.mxu0
          %v1401 = vadd.f32 0.0, %v1400
          %v1402 = vpop.f32.mrf.mxu0
          %v1403 = vadd.f32 0.0, %v1402
          %1404 = vdwg.mxu0
          %v1421 = vunpack.c.l.b16 %v1252
          %v1422 = vunpack.c.l.b16 %v1253
          %v1423 = vunpack.c.l.b16 %v1254
          %v1424 = vunpack.c.l.b16 %v1255
          %v1425 = vunpack.c.l.b16 %v1256
          %v1426 = vunpack.c.l.b16 %v1257
          %v1427 = vunpack.c.l.b16 %v1258
          %v1428 = vunpack.c.l.b16 %v1259
          %v1429 = vunpack.c.l.b16 %v1260
          %v1430 = vunpack.c.l.b16 %v1261
          %v1431 = vunpack.c.l.b16 %v1262
          %v1432 = vunpack.c.l.b16 %v1263
          %v1433 = vunpack.c.l.b16 %v1264
          %v1434 = vunpack.c.l.b16 %v1265
          %v1435 = vunpack.c.l.b16 %v1266
          %v1436 = vunpack.c.l.b16 %v1267
          %v1437 = vpack.c.b16 %v1422, %v1421
          %v1438 = vpack.c.b16 %v1424, %v1423
          %v1439 = vpack.c.b16 %v1426, %v1425
          %v1440 = vpack.c.b16 %v1428, %v1427
          %v1441 = vpack.c.b16 %v1430, %v1429
          %v1442 = vpack.c.b16 %v1432, %v1431
          %v1443 = vpack.c.b16 %v1434, %v1433
          %v1444 = vpack.c.b16 %v1436, %v1435
          %v1469 = vunpack.c.l.b16 %v1268
          %v1470 = vunpack.c.l.b16 %v1269
          %v1471 = vunpack.c.l.b16 %v1270
          %v1472 = vunpack.c.l.b16 %v1271
          %v1473 = vunpack.c.l.b16 %v1272
          %v1474 = vunpack.c.l.b16 %v1273
          %v1475 = vunpack.c.l.b16 %v1274
          %v1476 = vunpack.c.l.b16 %v1275
          %v1477 = vunpack.c.l.b16 %v1276
          %v1478 = vunpack.c.l.b16 %v1277
          %v1479 = vunpack.c.l.b16 %v1278
          %v1480 = vunpack.c.l.b16 %v1279
          %v1481 = vunpack.c.l.b16 %v1280
          %v1482 = vunpack.c.l.b16 %v1281
          %v1483 = vunpack.c.l.b16 %v1282
          %v1484 = vunpack.c.l.b16 %v1283
          %v1485 = vpack.c.b16 %v1470, %v1469
          %v1486 = vpack.c.b16 %v1472, %v1471
          %v1487 = vpack.c.b16 %v1474, %v1473
          %v1488 = vpack.c.b16 %v1476, %v1475
          %v1489 = vpack.c.b16 %v1478, %v1477
          %v1490 = vpack.c.b16 %v1480, %v1479
          %v1491 = vpack.c.b16 %v1482, %v1481
          %v1492 = vpack.c.b16 %v1484, %v1483
          %1501 = vmatpush.bf16.msra.mxu0 %v1492
          %1502 = vmatpush.bf16.msra.mxu0 %v1491
          %1503 = vmatpush.bf16.msra.mxu0 %v1490
          %1504 = vmatpush.bf16.msra.mxu0 %v1489
          %1505 = vmatpush.bf16.msra.mxu0 %v1488
          %1506 = vmatpush.bf16.msra.mxu0 %v1487
          %1507 = vmatpush.bf16.msra.mxu0 %v1486
          %1508 = vmatpush.bf16.msra.mxu0 %v1485
          %1509 = vmatmul.bf16.gmra.mxu0 %v1437
          %v1510 = vpop.f32.mrf.mxu0
          %v1511 = vadd.f32 %v1366, %v1510
          %v1512 = vpop.f32.mrf.mxu0
          %v1513 = vadd.f32 %v1368, %v1512
          %1514 = vmatmul.bf16.gmra.mxu0 %v1438
          %v1515 = vpop.f32.mrf.mxu0
          %v1516 = vadd.f32 %v1371, %v1515
          %v1517 = vpop.f32.mrf.mxu0
          %v1518 = vadd.f32 %v1373, %v1517
          %1519 = vmatmul.bf16.gmra.mxu0 %v1439
          %v1520 = vpop.f32.mrf.mxu0
          %v1521 = vadd.f32 %v1376, %v1520
          %v1522 = vpop.f32.mrf.mxu0
          %v1523 = vadd.f32 %v1378, %v1522
          %1524 = vmatmul.bf16.gmra.mxu0 %v1440
          %v1525 = vpop.f32.mrf.mxu0
          %v1526 = vadd.f32 %v1381, %v1525
          %v1527 = vpop.f32.mrf.mxu0
          %v1528 = vadd.f32 %v1383, %v1527
          %1529 = vmatmul.bf16.gmra.mxu0 %v1441
          %v1530 = vpop.f32.mrf.mxu0
          %v1531 = vadd.f32 %v1386, %v1530
          %v1532 = vpop.f32.mrf.mxu0
          %v1533 = vadd.f32 %v1388, %v1532
          %1534 = vmatmul.bf16.gmra.mxu0 %v1442
          %v1535 = vpop.f32.mrf.mxu0
          %v1536 = vadd.f32 %v1391, %v1535
          %v1537 = vpop.f32.mrf.mxu0
          %v1538 = vadd.f32 %v1393, %v1537
          %1539 = vmatmul.bf16.gmra.mxu0 %v1443
          %v1540 = vpop.f32.mrf.mxu0
          %v1541 = vadd.f32 %v1396, %v1540
          %v1542 = vpop.f32.mrf.mxu0
          %v1543 = vadd.f32 %v1398, %v1542
          %1544 = vmatmul.bf16.gmra.mxu0 %v1444
          %v1545 = vpop.f32.mrf.mxu0
          %v1546 = vadd.f32 %v1401, %v1545
          %v1547 = vpop.f32.mrf.mxu0
          %v1548 = vadd.f32 %v1403, %v1547
          %1549 = vdwg.mxu0
          %v1550 = vld [vmem:[%s12] sm:$0x1]
          %v1552 = vperm.slane %v1550, 0
          %v1554 = vadd.f32 %v1511, %v1552
          %v1555 = vadd.f32 %v1513, %v1552
          %v1556 = vadd.f32 %v1516, %v1552
          %v1557 = vadd.f32 %v1518, %v1552
          %v1558 = vadd.f32 %v1521, %v1552
          %v1559 = vadd.f32 %v1523, %v1552
          %v1560 = vadd.f32 %v1526, %v1552
          %v1561 = vadd.f32 %v1528, %v1552
          %v1562 = vadd.f32 %v1531, %v1552
          %v1563 = vadd.f32 %v1533, %v1552
          %v1564 = vadd.f32 %v1536, %v1552
          %v1565 = vadd.f32 %v1538, %v1552
          %v1566 = vadd.f32 %v1541, %v1552
          %v1567 = vadd.f32 %v1543, %v1552
          %v1568 = vadd.f32 %v1546, %v1552
          %v1569 = vadd.f32 %v1548, %v1552
          %v1570 = vmax.f32 %v1554, 0.0
          %v1571 = vmax.f32 %v1555, 0.0
          %v1572 = vmax.f32 %v1556, 0.0
          %v1573 = vmax.f32 %v1557, 0.0
          %v1574 = vmax.f32 %v1558, 0.0
          %v1575 = vmax.f32 %v1559, 0.0
          %v1576 = vmax.f32 %v1560, 0.0
          %v1577 = vmax.f32 %v1561, 0.0
          %v1578 = vmax.f32 %v1562, 0.0
          %v1579 = vmax.f32 %v1563, 0.0
          %v1580 = vmax.f32 %v1564, 0.0
          %v1581 = vmax.f32 %v1565, 0.0
          %v1582 = vmax.f32 %v1566, 0.0
          %v1583 = vmax.f32 %v1567, 0.0
          %v1584 = vmax.f32 %v1568, 0.0
          %v1585 = vmax.f32 %v1569, 0.0
          %v1586 = vpack.c.bf16 %v1571, %v1570
          %v1587 = vpack.c.bf16 %v1573, %v1572
          %v1588 = vpack.c.bf16 %v1575, %v1574
          %v1589 = vpack.c.bf16 %v1577, %v1576
          %v1590 = vpack.c.bf16 %v1579, %v1578
          %v1591 = vpack.c.bf16 %v1581, %v1580
          %v1592 = vpack.c.bf16 %v1583, %v1582
          %v1593 = vpack.c.bf16 %v1585, %v1584
          %v1594 = vld [vmem:[#allocation9] sm:$0xf]
          %v1595 = vld [vmem:[#allocation9 + $0x4] sm:$0xf]
          %v1596 = vld [vmem:[#allocation9 + $0x8] sm:$0xf]
          %v1597 = vld [vmem:[#allocation9 + $0xc] sm:$0xf]
          %v1598 = vld [vmem:[#allocation9 + $0x10] sm:$0xf]
          %v1599 = vld [vmem:[#allocation9 + $0x14] sm:$0xf]
          %v1600 = vld [vmem:[#allocation9 + $0x18] sm:$0xf]
          %v1601 = vld [vmem:[#allocation9 + $0x1c] sm:$0xf]
          %v1602 = vld [vmem:[#allocation9 + $0x20] sm:$0xf]
          %v1603 = vld [vmem:[#allocation9 + $0x24] sm:$0xf]
          %v1604 = vld [vmem:[#allocation9 + $0x28] sm:$0xf]
          %v1605 = vld [vmem:[#allocation9 + $0x2c] sm:$0xf]
          %v1606 = vld [vmem:[#allocation9 + $0x30] sm:$0xf]
          %v1607 = vld [vmem:[#allocation9 + $0x34] sm:$0xf]
          %v1608 = vld [vmem:[#allocation9 + $0x38] sm:$0xf]
          %v1609 = vld [vmem:[#allocation9 + $0x3c] sm:$0xf]
          %v1610 = vld [vmem:[%s14] sm:$0x1]
          %v1612 = vperm.slane %v1610, 0
          %v1630 = vunpack.c.l.b16 %v1594
          %v1631 = vunpack.c.l.b16 %v1595
          %v1632 = vunpack.c.l.b16 %v1596
          %v1633 = vunpack.c.l.b16 %v1597
          %v1634 = vunpack.c.l.b16 %v1598
          %v1635 = vunpack.c.l.b16 %v1599
          %v1636 = vunpack.c.l.b16 %v1600
          %v1637 = vunpack.c.l.b16 %v1601
          %v1638 = vunpack.c.l.b16 %v1602
          %v1639 = vunpack.c.l.b16 %v1603
          %v1640 = vunpack.c.l.b16 %v1604
          %v1641 = vunpack.c.l.b16 %v1605
          %v1642 = vunpack.c.l.b16 %v1606
          %v1643 = vunpack.c.l.b16 %v1607
          %v1644 = vunpack.c.l.b16 %v1608
          %v1645 = vunpack.c.l.b16 %v1609
          %v1646 = vpack.c.b16 %v1631, %v1630
          %v1647 = vpack.c.b16 %v1633, %v1632
          %v1648 = vpack.c.b16 %v1635, %v1634
          %v1649 = vpack.c.b16 %v1637, %v1636
          %v1650 = vpack.c.b16 %v1639, %v1638
          %v1651 = vpack.c.b16 %v1641, %v1640
          %v1652 = vpack.c.b16 %v1643, %v1642
          %v1653 = vpack.c.b16 %v1645, %v1644
          %1662 = vmatpush.bf16.msra.mxu0 %v1653
          %1663 = vmatpush.bf16.msra.mxu0 %v1652
          %1664 = vmatpush.bf16.msra.mxu0 %v1651
          %1665 = vmatpush.bf16.msra.mxu0 %v1650
          %1666 = vmatpush.bf16.msra.mxu0 %v1649
          %1667 = vmatpush.bf16.msra.mxu0 %v1648
          %1668 = vmatpush.bf16.msra.mxu0 %v1647
          %1669 = vmatpush.bf16.msra.mxu0 %v1646
          %1670 = vmatmul.bf16.gmra.mxu0 %v1586
          %v1671 = vpop.f32.mrf.mxu0
          %v1672 = vadd.f32 %v1612, %v1671
          %v1673 = vpop.f32.mrf.mxu0
          %v1674 = vadd.f32 %v1612, %v1673
          %1675 = vmatmul.bf16.gmra.mxu0 %v1587
          %v1676 = vpop.f32.mrf.mxu0
          %v1677 = vadd.f32 %v1612, %v1676
          %v1678 = vpop.f32.mrf.mxu0
          %v1679 = vadd.f32 %v1612, %v1678
          %1680 = vmatmul.bf16.gmra.mxu0 %v1588
          %v1681 = vpop.f32.mrf.mxu0
          %v1682 = vadd.f32 %v1612, %v1681
          %v1683 = vpop.f32.mrf.mxu0
          %v1684 = vadd.f32 %v1612, %v1683
          %1685 = vmatmul.bf16.gmra.mxu0 %v1589
          %v1686 = vpop.f32.mrf.mxu0
          %v1687 = vadd.f32 %v1612, %v1686
          %v1688 = vpop.f32.mrf.mxu0
          %v1689 = vadd.f32 %v1612, %v1688
          %1690 = vmatmul.bf16.gmra.mxu0 %v1590
          %v1691 = vpop.f32.mrf.mxu0
          %v1692 = vadd.f32 %v1612, %v1691
          %v1693 = vpop.f32.mrf.mxu0
          %v1694 = vadd.f32 %v1612, %v1693
          %1695 = vmatmul.bf16.gmra.mxu0 %v1591
          %v1696 = vpop.f32.mrf.mxu0
          %v1697 = vadd.f32 %v1612, %v1696
          %v1698 = vpop.f32.mrf.mxu0
          %v1699 = vadd.f32 %v1612, %v1698
          %1700 = vmatmul.bf16.gmra.mxu0 %v1592
          %v1701 = vpop.f32.mrf.mxu0
          %v1702 = vadd.f32 %v1612, %v1701
          %v1703 = vpop.f32.mrf.mxu0
          %v1704 = vadd.f32 %v1612, %v1703
          %1705 = vmatmul.bf16.gmra.mxu0 %v1593
          %v1706 = vpop.f32.mrf.mxu0
          %v1707 = vadd.f32 %v1612, %v1706
          %v1708 = vpop.f32.mrf.mxu0
          %v1709 = vadd.f32 %v1612, %v1708
          %1710 = vdwg.mxu0
          %v1711 = vpack.c.bf16 %v1672, %v1672
          %v1712 = vpack.c.bf16 %v1674, %v1674
          %v1713 = vpack.c.bf16 %v1677, %v1677
          %v1714 = vpack.c.bf16 %v1679, %v1679
          %v1715 = vpack.c.bf16 %v1682, %v1682
          %v1716 = vpack.c.bf16 %v1684, %v1684
          %v1717 = vpack.c.bf16 %v1687, %v1687
          %v1718 = vpack.c.bf16 %v1689, %v1689
          %v1719 = vpack.c.bf16 %v1692, %v1692
          %v1720 = vpack.c.bf16 %v1694, %v1694
          %v1721 = vpack.c.bf16 %v1697, %v1697
          %v1722 = vpack.c.bf16 %v1699, %v1699
          %v1723 = vpack.c.bf16 %v1702, %v1702
          %v1724 = vpack.c.bf16 %v1704, %v1704
          %v1725 = vpack.c.bf16 %v1707, %v1707
          %v1726 = vpack.c.bf16 %v1709, %v1709
          %1727 = vst [vmem:[#allocation11] sm:$0xf] %v1711
          %1728 = vst [vmem:[#allocation11 + $0x4] sm:$0xf] %v1712
          %1729 = vst [vmem:[#allocation11 + $0x8] sm:$0xf] %v1713
          %1730 = vst [vmem:[#allocation11 + $0xc] sm:$0xf] %v1714
          %1731 = vst [vmem:[#allocation11 + $0x10] sm:$0xf] %v1715
          %1732 = vst [vmem:[#allocation11 + $0x14] sm:$0xf] %v1716
          %1733 = vst [vmem:[#allocation11 + $0x18] sm:$0xf] %v1717
          %1734 = vst [vmem:[#allocation11 + $0x1c] sm:$0xf] %v1718
          %1735 = vst [vmem:[#allocation11 + $0x20] sm:$0xf] %v1719
          %1736 = vst [vmem:[#allocation11 + $0x24] sm:$0xf] %v1720
          %1737 = vst [vmem:[#allocation11 + $0x28] sm:$0xf] %v1721
          %1738 = vst [vmem:[#allocation11 + $0x2c] sm:$0xf] %v1722
          %1739 = vst [vmem:[#allocation11 + $0x30] sm:$0xf] %v1723
          %1740 = vst [vmem:[#allocation11 + $0x34] sm:$0xf] %v1724
          %1741 = vst [vmem:[#allocation11 + $0x38] sm:$0xf] %v1725
          %1742 = vst [vmem:[#allocation11 + $0x3c] sm:$0xf] %v1726
        $region104: #{tpu_custom_call.1} parent=79 // pred_fallthru
          _
        // Predicated region
        $region105: #{tpu_custom_call.1} parent=79 // pred_check
          %p1743 = pneg %p373
        $region106: #{tpu_custom_call.1} parent=79 // pred_check_branch
          %1745 = sbr.rel (%p1743) target = $region108
        $region107: #{tpu_custom_call.1} parent=79 // pred_region
          %1747 = vsyncadd [#allocation5], 0
          %s1748 = sshll.u32 [#allocation11], 4
          %s1749 = int_to_ptr.vmem [resolvable:$true] %s1748
          %s1750 = sshll.u32 %s15, 4
          %s1751 = int_to_ptr.hbm [resolvable:$true] %s1750
          %1756 = dma.vmem_to_hbm [thread:$0]  %s1749, 1024, %s1751, [#allocation5], 64, 64, 4
        $region108: #{tpu_custom_call.1} parent=79 // pred_fallthru
          _
        // Predicated region
        $region109: #{tpu_custom_call.1} parent=79 // pred_check
          %p1757 = pneg %p373
        $region110: #{tpu_custom_call.1} parent=79 // pred_check_branch
          %1759 = sbr.rel (%p1757) target = $region112
        $region111: #{tpu_custom_call.1} parent=79 // pred_region
          %1761 = dma.done [#allocation5], 1024
        $region112: #{tpu_custom_call.1} parent=79 // pred_fallthru
          _
      $region80: #{tpu_custom_call.1} parent=5 // pred_fallthru
        _
      %p1762 = scmp.le.s32.totalorder 2, %s25
      // Predicated region
      $region113: #{tpu_custom_call.1} parent=5 // pred_check
        %p1763 = pneg %p1762
      $region114: #{tpu_custom_call.1} parent=5 // pred_check_branch
        %1765 = sbr.rel (%p1763) target = $region116
      $region115: #{tpu_custom_call.1} parent=5 // pred_region
        %s1766 = ssub.s32 %s25, 2
      $region116: #{tpu_custom_call.1} parent=5 // pred_fallthru
        _
    $region6: #{tpu_custom_call.1} parent=1 // loop_footer
      %s29 = sadd.s32 1, %s25
    $region7: #{tpu_custom_call.1} parent=1 // loop_footer_branch
      %24 = sbr.rel target = $region3
    $region8: #{tpu_custom_call.1} parent=1 // loop_exit
      _
    %1767 = vsyncpa [#allocation4], 1
    %s1768 = scalar_lea.sflag [#allocation4], 1
    %1769 = vsyncpa %s1768, 1
    %1770 = vsyncpa [#allocation7], 1
    %1771 = vsyncpa [#allocation10], 1
    %1772 = vsyncpa [#allocation5], 1
    %s1773 = scalar_lea.sflag [#allocation5], 1
    %1774 = vsyncpa %s1773, 1

</llo_original>
